<compile_context>
chip_gen: v7x
topology: tpu7x:2x2x1
jax: 0.10.0
libtpu: 0.0.40
codegen_flags: <defaults>
</compile_context>

<pallas_src>
import jax
import jax.numpy as jnp
from jax.experimental import pallas as pl
from jax.experimental.pallas import tpu as pltpu


# ----------------------------------------------------------------------------
# Pallas kernels
# ----------------------------------------------------------------------------

def _conv1_kernel(x_ref, w_ref, b_ref, o_ref):
    # relu((patches @ W_bnfolded) + bias): bf16 MXU matmul, f32 accumulate,
    # f32 bias+ReLU epilogue, bf16 lane-dense store.
    acc = jnp.dot(x_ref[...], w_ref[...], preferred_element_type=jnp.float32)
    o_ref[...] = jnp.maximum(acc + b_ref[...], 0.0).astype(o_ref.dtype)


def _tail_kernel(x2_ref, w2_ref, b2_ref, w3_ref, b3_ref,
                 f1w_ref, f1b_ref, f2w_ref, f2b_ref,
                 f3w_ref, f3b_ref, f4w_ref, f4b_ref, o_ref):
    # conv2(+folded BN)+ReLU, conv3+ReLU (8 real taps), 4x (Linear+ReLU),
    # all chained in VMEM.  Padded columns stay exactly 0 (zero weight cols/rows,
    # zero bias pads, ReLU(0) == 0).
    B = o_ref.shape[0]

    # conv2: rows of x2 are ordered (spatial position p, batch b) = p*B + b.
    h2 = jnp.dot(x2_ref[...], w2_ref[...], preferred_element_type=jnp.float32)
    h2 = jnp.maximum(h2 + b2_ref[...], 0.0).astype(jnp.bfloat16)

    # conv3: its 4x4x4 window over the padded 2x2x2 input only touches taps
    # kd,kh,kw in {1,2}; accumulate those 8 taps with per-tap weight slabs.
    acc = jnp.zeros((B, w3_ref.shape[-1]), jnp.float32)
    for p in range(w3_ref.shape[0]):               # static, unrolled (8 taps)
        acc = acc + jnp.dot(h2[p * B:(p + 1) * B, :], w3_ref[p],
                            preferred_element_type=jnp.float32)
    h = jnp.maximum(acc + b3_ref[...], 0.0)

    # MLP: (Linear + ReLU) x 4
    for w_ref, b_ref in ((f1w_ref, f1b_ref), (f2w_ref, f2b_ref),
                         (f3w_ref, f3b_ref), (f4w_ref, f4b_ref)):
        acc = jnp.dot(h.astype(jnp.bfloat16), w_ref[...],
                      preferred_element_type=jnp.float32)
        h = jnp.maximum(acc + b_ref[...], 0.0)
    o_ref[...] = h.astype(o_ref.dtype)


# ----------------------------------------------------------------------------
# Pallas wrappers
# ----------------------------------------------------------------------------

def _full_spec(shape):
    # Full-extent block (exempt from the (8,128) divisibility rule).
    return pl.BlockSpec(shape, lambda i, _n=len(shape): (0,) * _n)


def conv1_bn_relu_call(patches, w_pad, bias_pad):
    """relu(patches @ W + b) in one single-step pallas_call, bf16 out."""
    M, K = patches.shape
    N = w_pad.shape[1]
    return pl.pallas_call(
        _conv1_kernel,
        out_shape=jax.ShapeDtypeStruct((M, N), jnp.bfloat16),
        grid_spec=pltpu.PrefetchScalarGridSpec(
            num_scalar_prefetch=0,
            grid=(1,),
            in_specs=[_full_spec((M, K)), _full_spec((K, N)), _full_spec((1, N))],
            out_specs=_full_spec((M, N)),
        ),
        compiler_params=pltpu.CompilerParams(dimension_semantics=("arbitrary",)),
        cost_estimate=pl.CostEstimate(
            flops=2 * M * K * N, transcendentals=0,
            bytes_accessed=M * K * 2 + K * N * 2 + N * 4 + M * N * 2),
    )(patches, w_pad, bias_pad)


def tail_call(x2, prep, batch):
    """conv2 + conv3 + 4-layer MLP fused into one pallas_call."""
    M2, K2 = x2.shape
    nt = prep["c3_w"].shape[0]
    return pl.pallas_call(
        _tail_kernel,
        out_shape=jax.ShapeDtypeStruct((batch, 128), jnp.float32),
        grid_spec=pltpu.PrefetchScalarGridSpec(
            num_scalar_prefetch=0,
            grid=(1,),
            in_specs=[
                _full_spec((M2, K2)),
                _full_spec((K2, 128)), _full_spec((1, 128)),
                _full_spec((nt, 128, 128)), _full_spec((1, 128)),
                _full_spec((128, 128)), _full_spec((1, 128)),
                _full_spec((128, 128)), _full_spec((1, 128)),
                _full_spec((128, 128)), _full_spec((1, 128)),
                _full_spec((128, 128)), _full_spec((1, 128)),
            ],
            out_specs=_full_spec((batch, 128)),
        ),
        compiler_params=pltpu.CompilerParams(dimension_semantics=("arbitrary",)),
        cost_estimate=pl.CostEstimate(
            flops=1_900_000, transcendentals=0, bytes_accessed=480_000),
    )(x2, prep["c2_w"], prep["c2_b"], prep["c3_w"], prep["c3_b"],
      prep["fc1_w"], prep["fc1_b"], prep["fc2_w"], prep["fc2_b"],
      prep["fc3_w"], prep["fc3_b"], prep["fc4_w"], prep["fc4_b"])


def _patches_ndhwc(x, k, s, p):
    """(B, D, H, W, C) -> (B*Do*Ho*Wo, C*k^3), features channel-major
    (c, kd, kh, kw) matching torch_weight.reshape(C_out, -1)."""
    pat = jax.lax.conv_general_dilated_patches(
        x, filter_shape=(k, k, k), window_strides=(s, s, s),
        padding=((p, p), (p, p), (p, p)),
        dimension_numbers=("NDHWC", "DHWIO", "NDHWC"))
    B, Do, Ho, Wo, K = pat.shape
    return pat, (B, Do, Ho, Wo, K)


# ----------------------------------------------------------------------------
# Parameters
# ----------------------------------------------------------------------------

def init_params(key):
    def nrm(k, shape, scale=0.1):
        return scale * jax.random.normal(k, shape, jnp.float32)

    ks = jax.random.split(key, 32)
    p = {}
    p["conv1_w"] = nrm(ks[0], (4, 1, 4, 4, 4))
    p["conv1_b"] = nrm(ks[1], (4,))
    p["bn1_gamma"] = 1.0 + nrm(ks[2], (4,))
    p["bn1_beta"] = nrm(ks[3], (4,))
    p["bn1_mean"] = nrm(ks[4], (4,))
    p["bn1_var"] = 1.0 + jnp.abs(nrm(ks[5], (4,)))
    p["conv2_w"] = nrm(ks[6], (8, 4, 4, 4, 4))
    p["conv2_b"] = nrm(ks[7], (8,))
    p["bn2_gamma"] = 1.0 + nrm(ks[8], (8,))
    p["bn2_beta"] = nrm(ks[9], (8,))
    p["bn2_mean"] = nrm(ks[10], (8,))
    p["bn2_var"] = 1.0 + jnp.abs(nrm(ks[11], (8,)))
    p["conv3_w"] = nrm(ks[12], (16, 8, 4, 4, 4))
    p["conv3_b"] = nrm(ks[13], (16,))
    dims = [(32, 16), (64, 32), (32, 64), (13, 32)]   # PyTorch Linear (out, in)
    for i, (o, ii) in enumerate(dims, start=1):
        p[f"fc{i}_w"] = nrm(ks[13 + 2 * i], (o, ii))
        p[f"fc{i}_b"] = nrm(ks[14 + 2 * i], (o,))
    return p


def prepare_params(p, eps=1e-5):
    """One-time prep (outside the per-forward path): fold eval-mode BN scale
    into the conv weight columns and shift into the bias, reshape conv weights
    into matmul form, build conv3's 8 per-tap slabs, zero-pad to 128 lanes,
    cast every MXU operand to bf16."""
    f32, bf16 = jnp.float32, jnp.bfloat16

    def pad_cols(w2d, n_pad):                 # (K, N) -> (K, n_pad) bf16
        K, N = w2d.shape
        return jnp.zeros((K, n_pad), bf16).at[:, :N].set(w2d.astype(bf16))

    def pad_row(v, n_pad):                    # (N,) -> (1, n_pad) f32
        N = v.shape[0]
        return jnp.zeros((1, n_pad), f32).at[0, :N].set(v.astype(f32))

    prep = {}

    # conv1 + BN1: BN(conv(x) + b) = conv_{W*s}(x) + (b*s + t)
    s1 = p["bn1_gamma"] / jnp.sqrt(p["bn1_var"] + eps)
    t1 = p["bn1_beta"] - p["bn1_mean"] * s1
    w1 = p["conv1_w"].reshape(4, -1).T * s1[None, :]          # (64, 4)
    prep["c1_w"] = pad_cols(w1, 128)
    prep["c1_b"] = pad_row(p["conv1_b"] * s1 + t1, 128)

    # conv2 + BN2
    s2 = p["bn2_gamma"] / jnp.sqrt(p["bn2_var"] + eps)
    t2 = p["bn2_beta"] - p["bn2_mean"] * s2
    w2 = p["conv2_w"].reshape(8, -1).T * s2[None, :]          # (256, 8)
    prep["c2_w"] = pad_cols(w2, 128)
    prep["c2_b"] = pad_row(p["conv2_b"] * s2 + t2, 128)

    # conv3: only taps kd,kh,kw in {1,2} see real (non-padding) input when the
    # 4x4x4/stride-3/pad-1 window is applied to the 2x2x2 conv2 output.
    slabs = []
    for d in range(2):
        for h in range(2):
            for w in range(2):
                s = p["conv3_w"][:, :, d + 1, h + 1, w + 1].T  # (8 in, 16 out)
                slabs.append(
                    jnp.zeros((128, 128), bf16).at[:8, :16].set(s.astype(bf16)))
    prep["c3_w"] = jnp.stack(slabs)                            # (8, 128, 128)
    prep["c3_b"] = pad_row(p["conv3_b"], 128)

    # MLP: Linear weight (out, in) -> (in, out), zero-padded to (128, 128)
    for i in range(1, 5):
        w = p[f"fc{i}_w"].T
        K, N = w.shape
        prep[f"fc{i}_w"] = jnp.zeros((128, 128), bf16).at[:K, :N].set(
            w.astype(bf16))
        prep[f"fc{i}_b"] = pad_row(p[f"fc{i}_b"], 128)
    return prep


# ----------------------------------------------------------------------------
# Forward pass
# ----------------------------------------------------------------------------

def dummy_network_forward(x_ncdhw, prep):
    # Single layout change + single cast: NCDHW f32 -> NDHWC bf16.
    x = jnp.transpose(x_ncdhw, (0, 2, 3, 4, 1)).astype(jnp.bfloat16)

    # conv1 + folded BN1 + ReLU (one pallas_call, full-extent single step)
    pat1, (B, D1, H1, W1, K1) = _patches_ndhwc(x, 4, 3, 1)
    h1 = conv1_bn_relu_call(pat1.reshape(B * D1 * H1 * W1, K1),
                            prep["c1_w"], prep["c1_b"])        # (250,128) bf16
    h1 = h1[:, :4].reshape(B, D1, H1, W1, 4)

    # conv2 patches in (position, batch) row order for the fused tail kernel
    pat2, (_, D2, H2, W2, K2) = _patches_ndhwc(h1, 4, 3, 1)    # (B,2,2,2,256)
    x2 = jnp.transpose(pat2, (1, 2, 3, 0, 4)).reshape(D2 * H2 * W2 * B, K2)

    # conv2 + conv3 + MLP fused (one pallas_call)
    out = tail_call(x2, prep, B)                               # (B, 128) f32
    return out[:, :13]


# ----------------------------------------------------------------------------
# Pure-JAX reference (validates conv/BN/patch-ordering semantics)
# ----------------------------------------------------------------------------

def reference_forward(x, p, eps=1e-5):
    dn = ("NCDHW", "OIDHW", "NCDHW")

    def conv(h, w, b):
        y = jax.lax.conv_general_dilated(
            h, w, (3, 3, 3), ((1, 1), (1, 1), (1, 1)), dimension_numbers=dn)
        return y + b.reshape(1, -1, 1, 1, 1)

    def bn(h, g, beta, m, v):
        s = (g / jnp.sqrt(v + eps)).reshape(1, -1, 1, 1, 1)
        return (h - m.reshape(1, -1, 1, 1, 1)) * s + beta.reshape(1, -1, 1, 1, 1)

    h = jax.nn.relu(bn(conv(x, p["conv1_w"], p["conv1_b"]),
                       p["bn1_gamma"], p["bn1_beta"], p["bn1_mean"], p["bn1_var"]))
    h = jax.nn.relu(bn(conv(h, p["conv2_w"], p["conv2_b"]),
                       p["bn2_gamma"], p["bn2_beta"], p["bn2_mean"], p["bn2_var"]))
    h = jax.nn.relu(conv(h, p["conv3_w"], p["conv3_b"]))
    h = h.reshape(h.shape[0], -1)            # 'bs ch l w h -> bs (ch l w h)'
    for i in range(1, 5):
        h = jax.nn.relu(h @ p[f"fc{i}_w"].T + p[f"fc{i}_b"])
    return h


if __name__ == "__main__":
    key = jax.random.PRNGKey(0)
    k_params, k_x = jax.random.split(key)
    params = init_params(k_params)
    prep = prepare_params(params)           # fold + reshape + pad + bf16, once

    # input (batch, channels=1, D, H, W) = (2, 1, 14, 14, 14):
    # spatial 14 -> 5 -> 2 -> 1 through the three stride-3 convs, so flattened
    # CNN features are exactly 16, matching Linear(16, 32).
    x = jax.random.normal(k_x, (2, 1, 14, 14, 14), jnp.float32)

    fwd = jax.jit(dummy_network_forward)
    out = jax.block_until_ready(fwd(x, prep))
    assert out.shape == (2, 13), out.shape
    assert bool(jnp.all(jnp.isfinite(out)))

    # Numeric check vs a pure-JAX f32 reference (bf16 MXU operands -> loose tol)
    ref = reference_forward(x, params)
    err = float(jnp.max(jnp.abs(out - ref)))
    assert err < 5e-2, f"max abs err {err}"

    print("KERNEL_OK")
</pallas_src>

<mosaic_0001>
module attributes {stable_mosaic.version = 11 : i64} {
  func.func @_conv1_kernel(%arg0: i32, %arg1: memref<250x64xbf16, #tpu.memory_space<vmem>>, %arg2: memref<64x128xbf16, #tpu.memory_space<vmem>>, %arg3: memref<1x128xf32, #tpu.memory_space<vmem>>, %arg4: memref<250x128xbf16, #tpu.memory_space<vmem>>) attributes {dimension_semantics = [#tpu.dimension_semantics<arbitrary>], iteration_bounds = array<i64: 1>, scalar_prefetch = 0 : i64, scratch_operands = 0 : i64, tpu.core_type = #tpu.core_type<tc>, window_params = [{pipeline_mode = #tpu.pipeline_mode<synchronous>, transform_indices = @transform_0, window_bounds = array<i64: 250, 64>}, {pipeline_mode = #tpu.pipeline_mode<synchronous>, transform_indices = @transform_1, window_bounds = array<i64: 64, 128>}, {pipeline_mode = #tpu.pipeline_mode<synchronous>, transform_indices = @transform_2, window_bounds = array<i64: 1, 128>}, {pipeline_mode = #tpu.pipeline_mode<synchronous>, transform_indices = @transform_3, window_bounds = array<i64: 250, 128>}]} {
    %c0 = arith.constant 0 : index
    %c0_0 = arith.constant 0 : index
    %0 = vector.load %arg1[%c0, %c0_0] : memref<250x64xbf16, #tpu.memory_space<vmem>>, vector<250x64xbf16>
    %c0_1 = arith.constant 0 : index
    %c0_2 = arith.constant 0 : index
    %1 = vector.load %arg2[%c0_1, %c0_2] : memref<64x128xbf16, #tpu.memory_space<vmem>>, vector<64x128xbf16>
    %cst = arith.constant dense<0.000000e+00> : vector<250x128xf32>
    %2 = tpu.matmul %0, %1, %cst {dimension_numbers = #tpu.dot_dimension_numbers<[1], [0], [0], [1], [0, 0, 1, 1], [], []>} : vector<250x64xbf16>, vector<64x128xbf16>, vector<250x128xf32> -> vector<250x128xf32>
    %c0_3 = arith.constant 0 : index
    %c0_4 = arith.constant 0 : index
    %3 = vector.load %arg3[%c0_3, %c0_4] : memref<1x128xf32, #tpu.memory_space<vmem>>, vector<1x128xf32>
    %4 = vector.broadcast %3 : vector<1x128xf32> to vector<250x128xf32>
    %5 = arith.addf %2, %4 : vector<250x128xf32>
    %cst_5 = arith.constant 0.000000e+00 : f32
    %6 = vector.broadcast %cst_5 : f32 to vector<250x128xf32>
    %7 = arith.maximumf %5, %6 : vector<250x128xf32>
    %8 = arith.truncf %7 : vector<250x128xf32> to vector<250x128xbf16>
    %c0_6 = arith.constant 0 : index
    %c0_7 = arith.constant 0 : index
    %9 = vector.load %arg4[%c0_6, %c0_7] : memref<250x128xbf16, #tpu.memory_space<vmem>>, vector<250x128xbf16>
    tpu.vector_store %arg4[%c0_6, %c0_7], %8 {strides = array<i32>} : memref<250x128xbf16, #tpu.memory_space<vmem>>, vector<250x128xbf16>,
    return
  }
  func.func @transform_0(%arg0: i32) -> (i32, i32) {
    %c0_i32 = arith.constant 0 : i32
    %c0_i32_0 = arith.constant 0 : i32
    %c0_i32_1 = arith.constant 0 : i32
    return %c0_i32, %c0_i32_0 : i32, i32
  }
  func.func @transform_1(%arg0: i32) -> (i32, i32) {
    %c0_i32 = arith.constant 0 : i32
    %c0_i32_0 = arith.constant 0 : i32
    %c0_i32_1 = arith.constant 0 : i32
    return %c0_i32, %c0_i32_0 : i32, i32
  }
  func.func @transform_2(%arg0: i32) -> (i32, i32) {
    %c0_i32 = arith.constant 0 : i32
    %c0_i32_0 = arith.constant 0 : i32
    %c0_i32_1 = arith.constant 0 : i32
    return %c0_i32, %c0_i32_0 : i32, i32
  }
  func.func @transform_3(%arg0: i32) -> (i32, i32) {
    %c0_i32 = arith.constant 0 : i32
    %c0_i32_0 = arith.constant 0 : i32
    %c0_i32_1 = arith.constant 0 : i32
    return %c0_i32, %c0_i32_0 : i32, i32
  }
}

module attributes {stable_mosaic.version = 11 : i64} {
  func.func @_tail_kernel(%arg0: i32, %arg1: memref<16x256xbf16, #tpu.memory_space<vmem>>, %arg2: memref<256x128xbf16, #tpu.memory_space<vmem>>, %arg3: memref<1x128xf32, #tpu.memory_space<vmem>>, %arg4: memref<8x128x128xbf16, #tpu.memory_space<vmem>>, %arg5: memref<1x128xf32, #tpu.memory_space<vmem>>, %arg6: memref<128x128xbf16, #tpu.memory_space<vmem>>, %arg7: memref<1x128xf32, #tpu.memory_space<vmem>>, %arg8: memref<128x128xbf16, #tpu.memory_space<vmem>>, %arg9: memref<1x128xf32, #tpu.memory_space<vmem>>, %arg10: memref<128x128xbf16, #tpu.memory_space<vmem>>, %arg11: memref<1x128xf32, #tpu.memory_space<vmem>>, %arg12: memref<128x128xbf16, #tpu.memory_space<vmem>>, %arg13: memref<1x128xf32, #tpu.memory_space<vmem>>, %arg14: memref<2x128xf32, #tpu.memory_space<vmem>>) attributes {dimension_semantics = [#tpu.dimension_semantics<arbitrary>], iteration_bounds = array<i64: 1>, scalar_prefetch = 0 : i64, scratch_operands = 0 : i64, tpu.core_type = #tpu.core_type<tc>, window_params = [{pipeline_mode = #tpu.pipeline_mode<synchronous>, transform_indices = @transform_0, window_bounds = array<i64: 16, 256>}, {pipeline_mode = #tpu.pipeline_mode<synchronous>, transform_indices = @transform_1, window_bounds = array<i64: 256, 128>}, {pipeline_mode = #tpu.pipeline_mode<synchronous>, transform_indices = @transform_2, window_bounds = array<i64: 1, 128>}, {pipeline_mode = #tpu.pipeline_mode<synchronous>, transform_indices = @transform_3, window_bounds = array<i64: 8, 128, 128>}, {pipeline_mode = #tpu.pipeline_mode<synchronous>, transform_indices = @transform_4, window_bounds = array<i64: 1, 128>}, {pipeline_mode = #tpu.pipeline_mode<synchronous>, transform_indices = @transform_5, window_bounds = array<i64: 128, 128>}, {pipeline_mode = #tpu.pipeline_mode<synchronous>, transform_indices = @transform_6, window_bounds = array<i64: 1, 128>}, {pipeline_mode = #tpu.pipeline_mode<synchronous>, transform_indices = @transform_7, window_bounds = array<i64: 128, 128>}, {pipeline_mode = #tpu.pipeline_mode<synchronous>, transform_indices = @transform_8, window_bounds = array<i64: 1, 128>}, {pipeline_mode = #tpu.pipeline_mode<synchronous>, transform_indices = @transform_9, window_bounds = array<i64: 128, 128>}, {pipeline_mode = #tpu.pipeline_mode<synchronous>, transform_indices = @transform_10, window_bounds = array<i64: 1, 128>}, {pipeline_mode = #tpu.pipeline_mode<synchronous>, transform_indices = @transform_11, window_bounds = array<i64: 128, 128>}, {pipeline_mode = #tpu.pipeline_mode<synchronous>, transform_indices = @transform_12, window_bounds = array<i64: 1, 128>}, {pipeline_mode = #tpu.pipeline_mode<synchronous>, transform_indices = @transform_13, window_bounds = array<i64: 2, 128>}]} {
    %c0 = arith.constant 0 : index
    %c0_0 = arith.constant 0 : index
    %0 = vector.load %arg1[%c0, %c0_0] : memref<16x256xbf16, #tpu.memory_space<vmem>>, vector<16x256xbf16>
    %c0_1 = arith.constant 0 : index
    %c0_2 = arith.constant 0 : index
    %1 = vector.load %arg2[%c0_1, %c0_2] : memref<256x128xbf16, #tpu.memory_space<vmem>>, vector<256x128xbf16>
    %cst = arith.constant dense<0.000000e+00> : vector<16x128xf32>
    %2 = tpu.matmul %0, %1, %cst {dimension_numbers = #tpu.dot_dimension_numbers<[1], [0], [0], [1], [0, 0, 1, 1], [], []>} : vector<16x256xbf16>, vector<256x128xbf16>, vector<16x128xf32> -> vector<16x128xf32>
    %c0_3 = arith.constant 0 : index
    %c0_4 = arith.constant 0 : index
    %3 = vector.load %arg3[%c0_3, %c0_4] : memref<1x128xf32, #tpu.memory_space<vmem>>, vector<1x128xf32>
    %4 = vector.broadcast %3 : vector<1x128xf32> to vector<16x128xf32>
    %5 = arith.addf %2, %4 : vector<16x128xf32>
    %cst_5 = arith.constant 0.000000e+00 : f32
    %6 = vector.broadcast %cst_5 : f32 to vector<16x128xf32>
    %7 = arith.maximumf %5, %6 : vector<16x128xf32>
    %8 = arith.truncf %7 : vector<16x128xf32> to vector<16x128xbf16>
    %cst_6 = arith.constant 0.000000e+00 : f32
    %9 = vector.broadcast %cst_6 : f32 to vector<2x128xf32>
    %10 = vector.extract_strided_slice %8 {offsets = [0, 0], sizes = [2, 128], strides = [1, 1]} : vector<16x128xbf16> to vector<2x128xbf16>
    %c0_7 = arith.constant 0 : index
    %c0_8 = arith.constant 0 : index
    %c0_9 = arith.constant 0 : index
    %11 = vector.load %arg4[%c0_7, %c0_8, %c0_9] : memref<8x128x128xbf16, #tpu.memory_space<vmem>>, vector<1x128x128xbf16>
    %12 = vector.shape_cast %11 : vector<1x128x128xbf16> to vector<128x128xbf16>
    %cst_10 = arith.constant dense<0.000000e+00> : vector<2x128xf32>
    %13 = tpu.matmul %10, %12, %cst_10 {dimension_numbers = #tpu.dot_dimension_numbers<[1], [0], [0], [1], [0, 0, 1, 1], [], []>} : vector<2x128xbf16>, vector<128x128xbf16>, vector<2x128xf32> -> vector<2x128xf32>
    %14 = arith.addf %9, %13 : vector<2x128xf32>
    %15 = vector.extract_strided_slice %8 {offsets = [2, 0], sizes = [2, 128], strides = [1, 1]} : vector<16x128xbf16> to vector<2x128xbf16>
    %c1 = arith.constant 1 : index
    %c0_11 = arith.constant 0 : index
    %c0_12 = arith.constant 0 : index
    %16 = vector.load %arg4[%c1, %c0_11, %c0_12] : memref<8x128x128xbf16, #tpu.memory_space<vmem>>, vector<1x128x128xbf16>
    %17 = vector.shape_cast %16 : vector<1x128x128xbf16> to vector<128x128xbf16>
    %cst_13 = arith.constant dense<0.000000e+00> : vector<2x128xf32>
    %18 = tpu.matmul %15, %17, %cst_13 {dimension_numbers = #tpu.dot_dimension_numbers<[1], [0], [0], [1], [0, 0, 1, 1], [], []>} : vector<2x128xbf16>, vector<128x128xbf16>, vector<2x128xf32> -> vector<2x128xf32>
    %19 = arith.addf %14, %18 : vector<2x128xf32>
    %20 = vector.extract_strided_slice %8 {offsets = [4, 0], sizes = [2, 128], strides = [1, 1]} : vector<16x128xbf16> to vector<2x128xbf16>
    %c2 = arith.constant 2 : index
    %c0_14 = arith.constant 0 : index
    %c0_15 = arith.constant 0 : index
    %21 = vector.load %arg4[%c2, %c0_14, %c0_15] : memref<8x128x128xbf16, #tpu.memory_space<vmem>>, vector<1x128x128xbf16>
    %22 = vector.shape_cast %21 : vector<1x128x128xbf16> to vector<128x128xbf16>
    %cst_16 = arith.constant dense<0.000000e+00> : vector<2x128xf32>
    %23 = tpu.matmul %20, %22, %cst_16 {dimension_numbers = #tpu.dot_dimension_numbers<[1], [0], [0], [1], [0, 0, 1, 1], [], []>} : vector<2x128xbf16>, vector<128x128xbf16>, vector<2x128xf32> -> vector<2x128xf32>
    %24 = arith.addf %19, %23 : vector<2x128xf32>
    %25 = vector.extract_strided_slice %8 {offsets = [6, 0], sizes = [2, 128], strides = [1, 1]} : vector<16x128xbf16> to vector<2x128xbf16>
    %c3 = arith.constant 3 : index
    %c0_17 = arith.constant 0 : index
    %c0_18 = arith.constant 0 : index
    %26 = vector.load %arg4[%c3, %c0_17, %c0_18] : memref<8x128x128xbf16, #tpu.memory_space<vmem>>, vector<1x128x128xbf16>
    %27 = vector.shape_cast %26 : vector<1x128x128xbf16> to vector<128x128xbf16>
    %cst_19 = arith.constant dense<0.000000e+00> : vector<2x128xf32>
    %28 = tpu.matmul %25, %27, %cst_19 {dimension_numbers = #tpu.dot_dimension_numbers<[1], [0], [0], [1], [0, 0, 1, 1], [], []>} : vector<2x128xbf16>, vector<128x128xbf16>, vector<2x128xf32> -> vector<2x128xf32>
    %29 = arith.addf %24, %28 : vector<2x128xf32>
    %30 = vector.extract_strided_slice %8 {offsets = [8, 0], sizes = [2, 128], strides = [1, 1]} : vector<16x128xbf16> to vector<2x128xbf16>
    %c4 = arith.constant 4 : index
    %c0_20 = arith.constant 0 : index
    %c0_21 = arith.constant 0 : index
    %31 = vector.load %arg4[%c4, %c0_20, %c0_21] : memref<8x128x128xbf16, #tpu.memory_space<vmem>>, vector<1x128x128xbf16>
    %32 = vector.shape_cast %31 : vector<1x128x128xbf16> to vector<128x128xbf16>
    %cst_22 = arith.constant dense<0.000000e+00> : vector<2x128xf32>
    %33 = tpu.matmul %30, %32, %cst_22 {dimension_numbers = #tpu.dot_dimension_numbers<[1], [0], [0], [1], [0, 0, 1, 1], [], []>} : vector<2x128xbf16>, vector<128x128xbf16>, vector<2x128xf32> -> vector<2x128xf32>
    %34 = arith.addf %29, %33 : vector<2x128xf32>
    %35 = vector.extract_strided_slice %8 {offsets = [10, 0], sizes = [2, 128], strides = [1, 1]} : vector<16x128xbf16> to vector<2x128xbf16>
    %c5 = arith.constant 5 : index
    %c0_23 = arith.constant 0 : index
    %c0_24 = arith.constant 0 : index
    %36 = vector.load %arg4[%c5, %c0_23, %c0_24] : memref<8x128x128xbf16, #tpu.memory_space<vmem>>, vector<1x128x128xbf16>
    %37 = vector.shape_cast %36 : vector<1x128x128xbf16> to vector<128x128xbf16>
    %cst_25 = arith.constant dense<0.000000e+00> : vector<2x128xf32>
    %38 = tpu.matmul %35, %37, %cst_25 {dimension_numbers = #tpu.dot_dimension_numbers<[1], [0], [0], [1], [0, 0, 1, 1], [], []>} : vector<2x128xbf16>, vector<128x128xbf16>, vector<2x128xf32> -> vector<2x128xf32>
    %39 = arith.addf %34, %38 : vector<2x128xf32>
    %40 = vector.extract_strided_slice %8 {offsets = [12, 0], sizes = [2, 128], strides = [1, 1]} : vector<16x128xbf16> to vector<2x128xbf16>
    %c6 = arith.constant 6 : index
    %c0_26 = arith.constant 0 : index
    %c0_27 = arith.constant 0 : index
    %41 = vector.load %arg4[%c6, %c0_26, %c0_27] : memref<8x128x128xbf16, #tpu.memory_space<vmem>>, vector<1x128x128xbf16>
    %42 = vector.shape_cast %41 : vector<1x128x128xbf16> to vector<128x128xbf16>
    %cst_28 = arith.constant dense<0.000000e+00> : vector<2x128xf32>
    %43 = tpu.matmul %40, %42, %cst_28 {dimension_numbers = #tpu.dot_dimension_numbers<[1], [0], [0], [1], [0, 0, 1, 1], [], []>} : vector<2x128xbf16>, vector<128x128xbf16>, vector<2x128xf32> -> vector<2x128xf32>
    %44 = arith.addf %39, %43 : vector<2x128xf32>
    %45 = vector.extract_strided_slice %8 {offsets = [14, 0], sizes = [2, 128], strides = [1, 1]} : vector<16x128xbf16> to vector<2x128xbf16>
    %c7 = arith.constant 7 : index
    %c0_29 = arith.constant 0 : index
    %c0_30 = arith.constant 0 : index
    %46 = vector.load %arg4[%c7, %c0_29, %c0_30] : memref<8x128x128xbf16, #tpu.memory_space<vmem>>, vector<1x128x128xbf16>
    %47 = vector.shape_cast %46 : vector<1x128x128xbf16> to vector<128x128xbf16>
    %cst_31 = arith.constant dense<0.000000e+00> : vector<2x128xf32>
    %48 = tpu.matmul %45, %47, %cst_31 {dimension_numbers = #tpu.dot_dimension_numbers<[1], [0], [0], [1], [0, 0, 1, 1], [], []>} : vector<2x128xbf16>, vector<128x128xbf16>, vector<2x128xf32> -> vector<2x128xf32>
    %49 = arith.addf %44, %48 : vector<2x128xf32>
    %c0_32 = arith.constant 0 : index
    %c0_33 = arith.constant 0 : index
    %50 = vector.load %arg5[%c0_32, %c0_33] : memref<1x128xf32, #tpu.memory_space<vmem>>, vector<1x128xf32>
    %51 = vector.broadcast %50 : vector<1x128xf32> to vector<2x128xf32>
    %52 = arith.addf %49, %51 : vector<2x128xf32>
    %cst_34 = arith.constant 0.000000e+00 : f32
    %53 = vector.broadcast %cst_34 : f32 to vector<2x128xf32>
    %54 = arith.maximumf %52, %53 : vector<2x128xf32>
    %55 = arith.truncf %54 : vector<2x128xf32> to vector<2x128xbf16>
    %c0_35 = arith.constant 0 : index
    %c0_36 = arith.constant 0 : index
    %56 = vector.load %arg6[%c0_35, %c0_36] : memref<128x128xbf16, #tpu.memory_space<vmem>>, vector<128x128xbf16>
    %cst_37 = arith.constant dense<0.000000e+00> : vector<2x128xf32>
    %57 = tpu.matmul %55, %56, %cst_37 {dimension_numbers = #tpu.dot_dimension_numbers<[1], [0], [0], [1], [0, 0, 1, 1], [], []>} : vector<2x128xbf16>, vector<128x128xbf16>, vector<2x128xf32> -> vector<2x128xf32>
    %c0_38 = arith.constant 0 : index
    %c0_39 = arith.constant 0 : index
    %58 = vector.load %arg7[%c0_38, %c0_39] : memref<1x128xf32, #tpu.memory_space<vmem>>, vector<1x128xf32>
    %59 = vector.broadcast %58 : vector<1x128xf32> to vector<2x128xf32>
    %60 = arith.addf %57, %59 : vector<2x128xf32>
    %cst_40 = arith.constant 0.000000e+00 : f32
    %61 = vector.broadcast %cst_40 : f32 to vector<2x128xf32>
    %62 = arith.maximumf %60, %61 : vector<2x128xf32>
    %63 = arith.truncf %62 : vector<2x128xf32> to vector<2x128xbf16>
    %c0_41 = arith.constant 0 : index
    %c0_42 = arith.constant 0 : index
    %64 = vector.load %arg8[%c0_41, %c0_42] : memref<128x128xbf16, #tpu.memory_space<vmem>>, vector<128x128xbf16>
    %cst_43 = arith.constant dense<0.000000e+00> : vector<2x128xf32>
    %65 = tpu.matmul %63, %64, %cst_43 {dimension_numbers = #tpu.dot_dimension_numbers<[1], [0], [0], [1], [0, 0, 1, 1], [], []>} : vector<2x128xbf16>, vector<128x128xbf16>, vector<2x128xf32> -> vector<2x128xf32>
    %c0_44 = arith.constant 0 : index
    %c0_45 = arith.constant 0 : index
    %66 = vector.load %arg9[%c0_44, %c0_45] : memref<1x128xf32, #tpu.memory_space<vmem>>, vector<1x128xf32>
    %67 = vector.broadcast %66 : vector<1x128xf32> to vector<2x128xf32>
    %68 = arith.addf %65, %67 : vector<2x128xf32>
    %cst_46 = arith.constant 0.000000e+00 : f32
    %69 = vector.broadcast %cst_46 : f32 to vector<2x128xf32>
    %70 = arith.maximumf %68, %69 : vector<2x128xf32>
    %71 = arith.truncf %70 : vector<2x128xf32> to vector<2x128xbf16>
    %c0_47 = arith.constant 0 : index
    %c0_48 = arith.constant 0 : index
    %72 = vector.load %arg10[%c0_47, %c0_48] : memref<128x128xbf16, #tpu.memory_space<vmem>>, vector<128x128xbf16>
    %cst_49 = arith.constant dense<0.000000e+00> : vector<2x128xf32>
    %73 = tpu.matmul %71, %72, %cst_49 {dimension_numbers = #tpu.dot_dimension_numbers<[1], [0], [0], [1], [0, 0, 1, 1], [], []>} : vector<2x128xbf16>, vector<128x128xbf16>, vector<2x128xf32> -> vector<2x128xf32>
    %c0_50 = arith.constant 0 : index
    %c0_51 = arith.constant 0 : index
    %74 = vector.load %arg11[%c0_50, %c0_51] : memref<1x128xf32, #tpu.memory_space<vmem>>, vector<1x128xf32>
    %75 = vector.broadcast %74 : vector<1x128xf32> to vector<2x128xf32>
    %76 = arith.addf %73, %75 : vector<2x128xf32>
    %cst_52 = arith.constant 0.000000e+00 : f32
    %77 = vector.broadcast %cst_52 : f32 to vector<2x128xf32>
    %78 = arith.maximumf %76, %77 : vector<2x128xf32>
    %79 = arith.truncf %78 : vector<2x128xf32> to vector<2x128xbf16>
    %c0_53 = arith.constant 0 : index
    %c0_54 = arith.constant 0 : index
    %80 = vector.load %arg12[%c0_53, %c0_54] : memref<128x128xbf16, #tpu.memory_space<vmem>>, vector<128x128xbf16>
    %cst_55 = arith.constant dense<0.000000e+00> : vector<2x128xf32>
    %81 = tpu.matmul %79, %80, %cst_55 {dimension_numbers = #tpu.dot_dimension_numbers<[1], [0], [0], [1], [0, 0, 1, 1], [], []>} : vector<2x128xbf16>, vector<128x128xbf16>, vector<2x128xf32> -> vector<2x128xf32>
    %c0_56 = arith.constant 0 : index
    %c0_57 = arith.constant 0 : index
    %82 = vector.load %arg13[%c0_56, %c0_57] : memref<1x128xf32, #tpu.memory_space<vmem>>, vector<1x128xf32>
    %83 = vector.broadcast %82 : vector<1x128xf32> to vector<2x128xf32>
    %84 = arith.addf %81, %83 : vector<2x128xf32>
    %cst_58 = arith.constant 0.000000e+00 : f32
    %85 = vector.broadcast %cst_58 : f32 to vector<2x128xf32>
    %86 = arith.maximumf %84, %85 : vector<2x128xf32>
    %c0_59 = arith.constant 0 : index
    %c0_60 = arith.constant 0 : index
    %87 = vector.load %arg14[%c0_59, %c0_60] : memref<2x128xf32, #tpu.memory_space<vmem>>, vector<2x128xf32>
    tpu.vector_store %arg14[%c0_59, %c0_60], %86 {strides = array<i32>} : memref<2x128xf32, #tpu.memory_space<vmem>>, vector<2x128xf32>,
    return
  }
  func.func @transform_0(%arg0: i32) -> (i32, i32) {
    %c0_i32 = arith.constant 0 : i32
    %c0_i32_0 = arith.constant 0 : i32
    %c0_i32_1 = arith.constant 0 : i32
    return %c0_i32, %c0_i32_0 : i32, i32
  }
  func.func @transform_1(%arg0: i32) -> (i32, i32) {
    %c0_i32 = arith.constant 0 : i32
    %c0_i32_0 = arith.constant 0 : i32
    %c0_i32_1 = arith.constant 0 : i32
    return %c0_i32, %c0_i32_0 : i32, i32
  }
  func.func @transform_2(%arg0: i32) -> (i32, i32) {
    %c0_i32 = arith.constant 0 : i32
    %c0_i32_0 = arith.constant 0 : i32
    %c0_i32_1 = arith.constant 0 : i32
    return %c0_i32, %c0_i32_0 : i32, i32
  }
  func.func @transform_3(%arg0: i32) -> (i32, i32, i32) {
    %c0_i32 = arith.constant 0 : i32
    %c0_i32_0 = arith.constant 0 : i32
    %c0_i32_1 = arith.constant 0 : i32
    %c0_i32_2 = arith.constant 0 : i32
    return %c0_i32, %c0_i32_0, %c0_i32_1 : i32, i32, i32
  }
  func.func @transform_4(%arg0: i32) -> (i32, i32) {
    %c0_i32 = arith.constant 0 : i32
    %c0_i32_0 = arith.constant 0 : i32
    %c0_i32_1 = arith.constant 0 : i32
    return %c0_i32, %c0_i32_0 : i32, i32
  }
  func.func @transform_5(%arg0: i32) -> (i32, i32) {
    %c0_i32 = arith.constant 0 : i32
    %c0_i32_0 = arith.constant 0 : i32
    %c0_i32_1 = arith.constant 0 : i32
    return %c0_i32, %c0_i32_0 : i32, i32
  }
  func.func @transform_6(%arg0: i32) -> (i32, i32) {
    %c0_i32 = arith.constant 0 : i32
    %c0_i32_0 = arith.constant 0 : i32
    %c0_i32_1 = arith.constant 0 : i32
    return %c0_i32, %c0_i32_0 : i32, i32
  }
  func.func @transform_7(%arg0: i32) -> (i32, i32) {
    %c0_i32 = arith.constant 0 : i32
    %c0_i32_0 = arith.constant 0 : i32
    %c0_i32_1 = arith.constant 0 : i32
    return %c0_i32, %c0_i32_0 : i32, i32
  }
  func.func @transform_8(%arg0: i32) -> (i32, i32) {
    %c0_i32 = arith.constant 0 : i32
    %c0_i32_0 = arith.constant 0 : i32
    %c0_i32_1 = arith.constant 0 : i32
    return %c0_i32, %c0_i32_0 : i32, i32
  }
  func.func @transform_9(%arg0: i32) -> (i32, i32) {
    %c0_i32 = arith.constant 0 : i32
    %c0_i32_0 = arith.constant 0 : i32
    %c0_i32_1 = arith.constant 0 : i32
    return %c0_i32, %c0_i32_0 : i32, i32
  }
  func.func @transform_10(%arg0: i32) -> (i32, i32) {
    %c0_i32 = arith.constant 0 : i32
    %c0_i32_0 = arith.constant 0 : i32
    %c0_i32_1 = arith.constant 0 : i32
    return %c0_i32, %c0_i32_0 : i32, i32
  }
  func.func @transform_11(%arg0: i32) -> (i32, i32) {
    %c0_i32 = arith.constant 0 : i32
    %c0_i32_0 = arith.constant 0 : i32
    %c0_i32_1 = arith.constant 0 : i32
    return %c0_i32, %c0_i32_0 : i32, i32
  }
  func.func @transform_12(%arg0: i32) -> (i32, i32) {
    %c0_i32 = arith.constant 0 : i32
    %c0_i32_0 = arith.constant 0 : i32
    %c0_i32_1 = arith.constant 0 : i32
    return %c0_i32, %c0_i32_0 : i32, i32
  }
  func.func @transform_13(%arg0: i32) -> (i32, i32) {
    %c0_i32 = arith.constant 0 : i32
    %c0_i32_0 = arith.constant 0 : i32
    %c0_i32_1 = arith.constant 0 : i32
    return %c0_i32, %c0_i32_0 : i32, i32
  }
}

</mosaic_0001>

<llo_original>
// kernel: dummy_network_forward.2
$region0: #{dummy_network_forward.2}
  #allocation0 [shape = 'u32[]', space=smem, size = 0x4, offset = 0x4, fixed_abs, tag = 'smem constant byte address 0x4 - core index']
  #allocation1 [shape = 'u32[144,128]{1,0:T(1,128)}', space=vmem, size = 0x12000, scoped, tag = 'internal scratch']
  %s0 = inlined_call_operand.vmem [shape: bf16[250,64], index: 0, kind: input, shape index: {}]
  %s1 = inlined_call_operand.vmem [shape: bf16[64,128], index: 1, kind: input, shape index: {}]
  %s2 = inlined_call_operand.vmem [shape: f32[1,128], index: 2, kind: input, shape index: {}]
  %s3 = inlined_call_operand.vmem [shape: bf16[250,128], index: 3, kind: output, shape index: {}]
  %s4 = sld [smem:[#allocation0]]
  $region22: #{dummy_network_forward.2} parent=0
    _
  %s6 = ssub.s32 1, %s4
  %s7 = scalar_select 0, %s6, %s4
  // Predicated region
  $region2: #{dummy_network_forward.2} parent=0 // pred_check
    _
  $region3: #{dummy_network_forward.2} parent=0 // pred_check_branch
    %9 = sbr.rel (0) target = $region5
  $region4: #{dummy_network_forward.2} parent=0 // pred_region
    _
  $region5: #{dummy_network_forward.2} parent=0 // pred_fallthru
    _
  // Predicated region
  $region6: #{dummy_network_forward.2} parent=0 // pred_check
    _
  $region7: #{dummy_network_forward.2} parent=0 // pred_check_branch
    %11 = sbr.rel (0) target = $region9
  $region8: #{dummy_network_forward.2} parent=0 // pred_region
    _
  $region9: #{dummy_network_forward.2} parent=0 // pred_fallthru
    _
  // Predicated region
  $region10: #{dummy_network_forward.2} parent=0 // pred_check
    _
  $region11: #{dummy_network_forward.2} parent=0 // pred_check_branch
    %13 = sbr.rel (0) target = $region13
  $region12: #{dummy_network_forward.2} parent=0 // pred_region
    _
  $region13: #{dummy_network_forward.2} parent=0 // pred_fallthru
    _
  %v15 = vld [vmem:[%s0] sm:$0xf]
  %v16 = vld [vmem:[%s0 + $0x4] sm:$0xf]
  %v17 = vld [vmem:[%s0 + $0x8] sm:$0xf]
  %v18 = vld [vmem:[%s0 + $0xc] sm:$0xf]
  %v19 = vld [vmem:[%s0 + $0x10] sm:$0xf]
  %v20 = vld [vmem:[%s0 + $0x14] sm:$0xf]
  %v21 = vld [vmem:[%s0 + $0x18] sm:$0xf]
  %v22 = vld [vmem:[%s0 + $0x1c] sm:$0xf]
  %v23 = vld [vmem:[%s0 + $0x20] sm:$0xf]
  %v24 = vld [vmem:[%s0 + $0x24] sm:$0xf]
  %v25 = vld [vmem:[%s0 + $0x28] sm:$0xf]
  %v26 = vld [vmem:[%s0 + $0x2c] sm:$0xf]
  %v27 = vld [vmem:[%s0 + $0x30] sm:$0xf]
  %v28 = vld [vmem:[%s0 + $0x34] sm:$0xf]
  %v29 = vld [vmem:[%s0 + $0x38] sm:$0xf]
  %v30 = vld [vmem:[%s0 + $0x3c] sm:$0xf]
  %v31 = vld [vmem:[%s0 + $0x40] sm:$0xf]
  %v32 = vld [vmem:[%s0 + $0x44] sm:$0xf]
  %v33 = vld [vmem:[%s0 + $0x48] sm:$0xf]
  %v34 = vld [vmem:[%s0 + $0x4c] sm:$0xf]
  %v35 = vld [vmem:[%s0 + $0x50] sm:$0xf]
  %v36 = vld [vmem:[%s0 + $0x54] sm:$0xf]
  %v37 = vld [vmem:[%s0 + $0x58] sm:$0xf]
  %v38 = vld [vmem:[%s0 + $0x5c] sm:$0xf]
  %v39 = vld [vmem:[%s0 + $0x60] sm:$0xf]
  %v40 = vld [vmem:[%s0 + $0x64] sm:$0xf]
  %v41 = vld [vmem:[%s0 + $0x68] sm:$0xf]
  %v42 = vld [vmem:[%s0 + $0x6c] sm:$0xf]
  %v43 = vld [vmem:[%s0 + $0x70] sm:$0xf]
  %v44 = vld [vmem:[%s0 + $0x74] sm:$0xf]
  %v45 = vld [vmem:[%s0 + $0x78] sm:$0xf]
  %v46 = vld [vmem:[%s0 + $0x7c] sm:$0x1]
  %v47 = vld [vmem:[%s1] sm:$0xf]
  %v48 = vld [vmem:[%s1 + $0x4] sm:$0xf]
  %v49 = vld [vmem:[%s1 + $0x8] sm:$0xf]
  %v50 = vld [vmem:[%s1 + $0xc] sm:$0xf]
  %v51 = vld [vmem:[%s1 + $0x10] sm:$0xf]
  %v52 = vld [vmem:[%s1 + $0x14] sm:$0xf]
  %v53 = vld [vmem:[%s1 + $0x18] sm:$0xf]
  %v54 = vld [vmem:[%s1 + $0x1c] sm:$0xf]
  %v55 = vld [vmem:[%s2] sm:$0x1]
  %v57 = vlaneseq
  %v58 = vshrl.u32 %v57, 7
  %v59 = vsub.s32 0, %v58
  %v60 = vrot.slane %v55, %v59
  %v94 = vunpack.c.l.b16 %v15
  %v95 = vunpack.c.l.b16 %v16
  %v96 = vunpack.c.l.b16 %v17
  %v97 = vunpack.c.l.b16 %v18
  %v98 = vunpack.c.l.b16 %v19
  %v99 = vunpack.c.l.b16 %v20
  %v100 = vunpack.c.l.b16 %v21
  %v101 = vunpack.c.l.b16 %v22
  %v102 = vunpack.c.l.b16 %v23
  %v103 = vunpack.c.l.b16 %v24
  %v104 = vunpack.c.l.b16 %v25
  %v105 = vunpack.c.l.b16 %v26
  %v106 = vunpack.c.l.b16 %v27
  %v107 = vunpack.c.l.b16 %v28
  %v108 = vunpack.c.l.b16 %v29
  %v109 = vunpack.c.l.b16 %v30
  %v110 = vunpack.c.l.b16 %v31
  %v111 = vunpack.c.l.b16 %v32
  %v112 = vunpack.c.l.b16 %v33
  %v113 = vunpack.c.l.b16 %v34
  %v114 = vunpack.c.l.b16 %v35
  %v115 = vunpack.c.l.b16 %v36
  %v116 = vunpack.c.l.b16 %v37
  %v117 = vunpack.c.l.b16 %v38
  %v118 = vunpack.c.l.b16 %v39
  %v119 = vunpack.c.l.b16 %v40
  %v120 = vunpack.c.l.b16 %v41
  %v121 = vunpack.c.l.b16 %v42
  %v122 = vunpack.c.l.b16 %v43
  %v123 = vunpack.c.l.b16 %v44
  %v124 = vunpack.c.l.b16 %v45
  %v125 = vunpack.c.l.b16 %v46
  %v126 = vpack.c.b16 %v95, %v94
  %v127 = vpack.c.b16 %v97, %v96
  %v128 = vpack.c.b16 %v99, %v98
  %v129 = vpack.c.b16 %v101, %v100
  %v130 = vpack.c.b16 %v103, %v102
  %v131 = vpack.c.b16 %v105, %v104
  %v132 = vpack.c.b16 %v107, %v106
  %v133 = vpack.c.b16 %v109, %v108
  %v134 = vpack.c.b16 %v111, %v110
  %v135 = vpack.c.b16 %v113, %v112
  %v136 = vpack.c.b16 %v115, %v114
  %v137 = vpack.c.b16 %v117, %v116
  %v138 = vpack.c.b16 %v119, %v118
  %v139 = vpack.c.b16 %v121, %v120
  %v140 = vpack.c.b16 %v123, %v122
  %v141 = vpack.c.b16 %v125, %v124
  %v150 = vunpack.c.l.b16 %v47
  %v151 = vunpack.c.l.b16 %v48
  %v152 = vunpack.c.l.b16 %v49
  %v153 = vunpack.c.l.b16 %v50
  %v154 = vunpack.c.l.b16 %v51
  %v155 = vunpack.c.l.b16 %v52
  %v156 = vunpack.c.l.b16 %v53
  %v157 = vunpack.c.l.b16 %v54
  %v158 = vpack.c.b16 %v151, %v150
  %v159 = vpack.c.b16 %v153, %v152
  %v160 = vpack.c.b16 %v155, %v154
  %v161 = vpack.c.b16 %v157, %v156
  %vm166 = vcmask 523264
  %v168 = vsel %vm166, %v126, 0
  %v171 = vsel %vm166, %v127, 0
  %v174 = vsel %vm166, %v128, 0
  %v177 = vsel %vm166, %v129, 0
  %v180 = vsel %vm166, %v130, 0
  %v183 = vsel %vm166, %v131, 0
  %v186 = vsel %vm166, %v132, 0
  %v189 = vsel %vm166, %v133, 0
  %v192 = vsel %vm166, %v134, 0
  %v195 = vsel %vm166, %v135, 0
  %v198 = vsel %vm166, %v136, 0
  %v201 = vsel %vm166, %v137, 0
  %v204 = vsel %vm166, %v138, 0
  %v207 = vsel %vm166, %v139, 0
  %v210 = vsel %vm166, %v140, 0
  %v213 = vsel %vm166, %v141, 0
  %215 = vmatprep.subr.bf16.mxu0 0
  %216 = vmatpush1.bf16.msra.mxu0 %v158
  %217 = vmatprep.subr.bf16.mxu0 0
  %218 = vmatpush1.bf16.msra.mxu0 %v159
  %219 = vmatprep.subr.bf16.mxu0 0
  %220 = vmatpush1.bf16.msra.mxu0 %v160
  %221 = vmatprep.subr.bf16.mxu0 0
  %222 = vmatpush1.bf16.msra.mxu0 %v161
  %223 = vmatprep.subr.bf16.mxu0 0
  %224 = vmatpush1.bf16.msra.mxu0 0
  %225 = vmatprep.subr.bf16.mxu0 0
  %226 = vmatpush1.bf16.msra.mxu0 0
  %227 = vmatprep.subr.bf16.mxu0 0
  %228 = vmatpush1.bf16.msra.mxu0 0
  %229 = vmatprep.subr.bf16.mxu0 0
  %230 = vmatpush1.bf16.msra.mxu0 0
  %231 = vmatprep.subr.bf16.mxu0 0
  %232 = vmatpush1.bf16.msra.mxu0 0
  %233 = vmatprep.subr.bf16.mxu0 0
  %234 = vmatpush1.bf16.msra.mxu0 0
  %235 = vmatprep.subr.bf16.mxu0 0
  %236 = vmatpush1.bf16.msra.mxu0 0
  %237 = vmatprep.subr.bf16.mxu0 0
  %238 = vmatpush1.bf16.msra.mxu0 0
  %239 = vmatprep.subr.bf16.mxu0 0
  %240 = vmatpush1.bf16.msra.mxu0 0
  %241 = vmatprep.subr.bf16.mxu0 0
  %242 = vmatpush1.bf16.msra.mxu0 0
  %243 = vmatprep.subr.bf16.mxu0 0
  %244 = vmatpush1.bf16.msra.mxu0 0
  %245 = vmatprep.subr.bf16.mxu0 0
  %246 = vmatpush1.bf16.msra.mxu0 0
  %247 = vmatprep.mubr.bf16.mxu0 0
  %248 = vmatmul.mubr.bf16.gmra.mrb[0].mxu0 %v168
  %v249 = vpop.f32.mrb[0].mxu0
  %v250 = vadd.f32 %v60, %v249
  %v251 = vpop.f32.mrb[0].mxu0
  %v252 = vpop.f32.mrb[0].mxu0
  %v253 = vadd.f32 %v60, %v252
  %v254 = vpop.f32.mrb[0].mxu0
  %255 = vmatprep.mubr.bf16.mxu0 0
  %256 = vmatmul.mubr.bf16.gmra.mrb[0].mxu0 %v171
  %v257 = vpop.f32.mrb[0].mxu0
  %v258 = vadd.f32 %v60, %v257
  %v259 = vpop.f32.mrb[0].mxu0
  %v260 = vpop.f32.mrb[0].mxu0
  %v261 = vadd.f32 %v60, %v260
  %v262 = vpop.f32.mrb[0].mxu0
  %263 = vmatprep.mubr.bf16.mxu0 0
  %264 = vmatmul.mubr.bf16.gmra.mrb[0].mxu0 %v174
  %v265 = vpop.f32.mrb[0].mxu0
  %v266 = vadd.f32 %v60, %v265
  %v267 = vpop.f32.mrb[0].mxu0
  %v268 = vpop.f32.mrb[0].mxu0
  %v269 = vadd.f32 %v60, %v268
  %v270 = vpop.f32.mrb[0].mxu0
  %271 = vmatprep.mubr.bf16.mxu0 0
  %272 = vmatmul.mubr.bf16.gmra.mrb[0].mxu0 %v177
  %v273 = vpop.f32.mrb[0].mxu0
  %v274 = vadd.f32 %v60, %v273
  %v275 = vpop.f32.mrb[0].mxu0
  %v276 = vpop.f32.mrb[0].mxu0
  %v277 = vadd.f32 %v60, %v276
  %v278 = vpop.f32.mrb[0].mxu0
  %279 = vmatprep.mubr.bf16.mxu0 0
  %280 = vmatmul.mubr.bf16.gmra.mrb[0].mxu0 %v180
  %v281 = vpop.f32.mrb[0].mxu0
  %v282 = vadd.f32 %v60, %v281
  %v283 = vpop.f32.mrb[0].mxu0
  %v284 = vpop.f32.mrb[0].mxu0
  %v285 = vadd.f32 %v60, %v284
  %v286 = vpop.f32.mrb[0].mxu0
  %287 = vmatprep.mubr.bf16.mxu0 0
  %288 = vmatmul.mubr.bf16.gmra.mrb[0].mxu0 %v183
  %v289 = vpop.f32.mrb[0].mxu0
  %v290 = vadd.f32 %v60, %v289
  %v291 = vpop.f32.mrb[0].mxu0
  %v292 = vpop.f32.mrb[0].mxu0
  %v293 = vadd.f32 %v60, %v292
  %v294 = vpop.f32.mrb[0].mxu0
  %295 = vmatprep.mubr.bf16.mxu0 0
  %296 = vmatmul.mubr.bf16.gmra.mrb[0].mxu0 %v186
  %v297 = vpop.f32.mrb[0].mxu0
  %v298 = vadd.f32 %v60, %v297
  %v299 = vpop.f32.mrb[0].mxu0
  %v300 = vpop.f32.mrb[0].mxu0
  %v301 = vadd.f32 %v60, %v300
  %v302 = vpop.f32.mrb[0].mxu0
  %303 = vmatprep.mubr.bf16.mxu0 0
  %304 = vmatmul.mubr.bf16.gmra.mrb[0].mxu0 %v189
  %v305 = vpop.f32.mrb[0].mxu0
  %v306 = vadd.f32 %v60, %v305
  %v307 = vpop.f32.mrb[0].mxu0
  %v308 = vpop.f32.mrb[0].mxu0
  %v309 = vadd.f32 %v60, %v308
  %v310 = vpop.f32.mrb[0].mxu0
  %311 = vmatprep.mubr.bf16.mxu0 0
  %312 = vmatmul.mubr.bf16.gmra.mrb[0].mxu0 %v192
  %v313 = vpop.f32.mrb[0].mxu0
  %v314 = vadd.f32 %v60, %v313
  %v315 = vpop.f32.mrb[0].mxu0
  %v316 = vpop.f32.mrb[0].mxu0
  %v317 = vadd.f32 %v60, %v316
  %v318 = vpop.f32.mrb[0].mxu0
  %319 = vmatprep.mubr.bf16.mxu0 0
  %320 = vmatmul.mubr.bf16.gmra.mrb[0].mxu0 %v195
  %v321 = vpop.f32.mrb[0].mxu0
  %v322 = vadd.f32 %v60, %v321
  %v323 = vpop.f32.mrb[0].mxu0
  %v324 = vpop.f32.mrb[0].mxu0
  %v325 = vadd.f32 %v60, %v324
  %v326 = vpop.f32.mrb[0].mxu0
  %327 = vmatprep.mubr.bf16.mxu0 0
  %328 = vmatmul.mubr.bf16.gmra.mrb[0].mxu0 %v198
  %v329 = vpop.f32.mrb[0].mxu0
  %v330 = vadd.f32 %v60, %v329
  %v331 = vpop.f32.mrb[0].mxu0
  %v332 = vpop.f32.mrb[0].mxu0
  %v333 = vadd.f32 %v60, %v332
  %v334 = vpop.f32.mrb[0].mxu0
  %335 = vmatprep.mubr.bf16.mxu0 0
  %336 = vmatmul.mubr.bf16.gmra.mrb[0].mxu0 %v201
  %v337 = vpop.f32.mrb[0].mxu0
  %v338 = vadd.f32 %v60, %v337
  %v339 = vpop.f32.mrb[0].mxu0
  %v340 = vpop.f32.mrb[0].mxu0
  %v341 = vadd.f32 %v60, %v340
  %v342 = vpop.f32.mrb[0].mxu0
  %343 = vmatprep.mubr.bf16.mxu0 0
  %344 = vmatmul.mubr.bf16.gmra.mrb[0].mxu0 %v204
  %v345 = vpop.f32.mrb[0].mxu0
  %v346 = vadd.f32 %v60, %v345
  %v347 = vpop.f32.mrb[0].mxu0
  %v348 = vpop.f32.mrb[0].mxu0
  %v349 = vadd.f32 %v60, %v348
  %v350 = vpop.f32.mrb[0].mxu0
  %351 = vmatprep.mubr.bf16.mxu0 0
  %352 = vmatmul.mubr.bf16.gmra.mrb[0].mxu0 %v207
  %v353 = vpop.f32.mrb[0].mxu0
  %v354 = vadd.f32 %v60, %v353
  %v355 = vpop.f32.mrb[0].mxu0
  %v356 = vpop.f32.mrb[0].mxu0
  %v357 = vadd.f32 %v60, %v356
  %v358 = vpop.f32.mrb[0].mxu0
  %359 = vmatprep.mubr.bf16.mxu0 0
  %360 = vmatmul.mubr.bf16.gmra.mrb[0].mxu0 %v210
  %v361 = vpop.f32.mrb[0].mxu0
  %v362 = vadd.f32 %v60, %v361
  %v363 = vpop.f32.mrb[0].mxu0
  %v364 = vpop.f32.mrb[0].mxu0
  %v365 = vadd.f32 %v60, %v364
  %v366 = vpop.f32.mrb[0].mxu0
  %367 = vmatprep.mubr.bf16.mxu0 0
  %368 = vmatmul.mubr.bf16.gmra.mrb[0].mxu0 %v213
  %v369 = vpop.f32.mrb[0].mxu0
  %v370 = vadd.f32 %v60, %v369
  %v371 = vpop.f32.mrb[0].mxu0
  %v372 = vpop.f32.mrb[0].mxu0
  %v373 = vadd.f32 %v60, %v372
  %v374 = vpop.f32.mrb[0].mxu0
  %375 = vdwg.mxu0
  %v376 = vmax.f32 %v250, 0.0
  %v377 = vmax.f32 %v253, 0.0
  %v378 = vmax.f32 %v258, 0.0
  %v379 = vmax.f32 %v261, 0.0
  %v380 = vmax.f32 %v266, 0.0
  %v381 = vmax.f32 %v269, 0.0
  %v382 = vmax.f32 %v274, 0.0
  %v383 = vmax.f32 %v277, 0.0
  %v384 = vmax.f32 %v282, 0.0
  %v385 = vmax.f32 %v285, 0.0
  %v386 = vmax.f32 %v290, 0.0
  %v387 = vmax.f32 %v293, 0.0
  %v388 = vmax.f32 %v298, 0.0
  %v389 = vmax.f32 %v301, 0.0
  %v390 = vmax.f32 %v306, 0.0
  %v391 = vmax.f32 %v309, 0.0
  %v392 = vmax.f32 %v314, 0.0
  %v393 = vmax.f32 %v317, 0.0
  %v394 = vmax.f32 %v322, 0.0
  %v395 = vmax.f32 %v325, 0.0
  %v396 = vmax.f32 %v330, 0.0
  %v397 = vmax.f32 %v333, 0.0
  %v398 = vmax.f32 %v338, 0.0
  %v399 = vmax.f32 %v341, 0.0
  %v400 = vmax.f32 %v346, 0.0
  %v401 = vmax.f32 %v349, 0.0
  %v402 = vmax.f32 %v354, 0.0
  %v403 = vmax.f32 %v357, 0.0
  %v404 = vmax.f32 %v362, 0.0
  %v405 = vmax.f32 %v365, 0.0
  %v406 = vmax.f32 %v370, 0.0
  %v407 = vmax.f32 %v373, 0.0
  %v408 = vpack.c.bf16 %v377, %v376
  %v409 = vpack.c.bf16 %v379, %v378
  %v410 = vpack.c.bf16 %v381, %v380
  %v411 = vpack.c.bf16 %v383, %v382
  %v412 = vpack.c.bf16 %v385, %v384
  %v413 = vpack.c.bf16 %v387, %v386
  %v414 = vpack.c.bf16 %v389, %v388
  %v415 = vpack.c.bf16 %v391, %v390
  %v416 = vpack.c.bf16 %v393, %v392
  %v417 = vpack.c.bf16 %v395, %v394
  %v418 = vpack.c.bf16 %v397, %v396
  %v419 = vpack.c.bf16 %v399, %v398
  %v420 = vpack.c.bf16 %v401, %v400
  %v421 = vpack.c.bf16 %v403, %v402
  %v422 = vpack.c.bf16 %v405, %v404
  %v423 = vpack.c.bf16 %v407, %v406
  %v440 = vunpack.c.l.b16 %v408
  %v441 = vunpack.c.h.b16 %v408
  %v442 = vunpack.c.l.b16 %v409
  %v443 = vunpack.c.h.b16 %v409
  %v444 = vunpack.c.l.b16 %v410
  %v445 = vunpack.c.h.b16 %v410
  %v446 = vunpack.c.l.b16 %v411
  %v447 = vunpack.c.h.b16 %v411
  %v448 = vunpack.c.l.b16 %v412
  %v449 = vunpack.c.h.b16 %v412
  %v450 = vunpack.c.l.b16 %v413
  %v451 = vunpack.c.h.b16 %v413
  %v452 = vunpack.c.l.b16 %v414
  %v453 = vunpack.c.h.b16 %v414
  %v454 = vunpack.c.l.b16 %v415
  %v455 = vunpack.c.h.b16 %v415
  %v456 = vunpack.c.l.b16 %v416
  %v457 = vunpack.c.h.b16 %v416
  %v458 = vunpack.c.l.b16 %v417
  %v459 = vunpack.c.h.b16 %v417
  %v460 = vunpack.c.l.b16 %v418
  %v461 = vunpack.c.h.b16 %v418
  %v462 = vunpack.c.l.b16 %v419
  %v463 = vunpack.c.h.b16 %v419
  %v464 = vunpack.c.l.b16 %v420
  %v465 = vunpack.c.h.b16 %v420
  %v466 = vunpack.c.l.b16 %v421
  %v467 = vunpack.c.h.b16 %v421
  %v468 = vunpack.c.l.b16 %v422
  %v469 = vunpack.c.h.b16 %v422
  %v470 = vunpack.c.l.b16 %v423
  %v471 = vunpack.c.h.b16 %v423
  %v472 = vpack.c.b16 %v440, %v440
  %v473 = vpack.c.b16 %v441, %v441
  %v474 = vpack.c.b16 %v442, %v442
  %v475 = vpack.c.b16 %v443, %v443
  %v476 = vpack.c.b16 %v444, %v444
  %v477 = vpack.c.b16 %v445, %v445
  %v478 = vpack.c.b16 %v446, %v446
  %v479 = vpack.c.b16 %v447, %v447
  %v480 = vpack.c.b16 %v448, %v448
  %v481 = vpack.c.b16 %v449, %v449
  %v482 = vpack.c.b16 %v450, %v450
  %v483 = vpack.c.b16 %v451, %v451
  %v484 = vpack.c.b16 %v452, %v452
  %v485 = vpack.c.b16 %v453, %v453
  %v486 = vpack.c.b16 %v454, %v454
  %v487 = vpack.c.b16 %v455, %v455
  %v488 = vpack.c.b16 %v456, %v456
  %v489 = vpack.c.b16 %v457, %v457
  %v490 = vpack.c.b16 %v458, %v458
  %v491 = vpack.c.b16 %v459, %v459
  %v492 = vpack.c.b16 %v460, %v460
  %v493 = vpack.c.b16 %v461, %v461
  %v494 = vpack.c.b16 %v462, %v462
  %v495 = vpack.c.b16 %v463, %v463
  %v496 = vpack.c.b16 %v464, %v464
  %v497 = vpack.c.b16 %v465, %v465
  %v498 = vpack.c.b16 %v466, %v466
  %v499 = vpack.c.b16 %v467, %v467
  %v500 = vpack.c.b16 %v468, %v468
  %v501 = vpack.c.b16 %v469, %v469
  %v502 = vpack.c.b16 %v470, %v470
  %v503 = vpack.c.b16 %v471, %v471
  %536 = vst [vmem:[%s3] sm:$0xf] %v472
  %537 = vst [vmem:[%s3 + $0x4] sm:$0xf] %v473
  %538 = vst [vmem:[%s3 + $0x8] sm:$0xf] %v474
  %539 = vst [vmem:[%s3 + $0xc] sm:$0xf] %v475
  %540 = vst [vmem:[%s3 + $0x10] sm:$0xf] %v476
  %541 = vst [vmem:[%s3 + $0x14] sm:$0xf] %v477
  %542 = vst [vmem:[%s3 + $0x18] sm:$0xf] %v478
  %543 = vst [vmem:[%s3 + $0x1c] sm:$0xf] %v479
  %544 = vst [vmem:[%s3 + $0x20] sm:$0xf] %v480
  %545 = vst [vmem:[%s3 + $0x24] sm:$0xf] %v481
  %546 = vst [vmem:[%s3 + $0x28] sm:$0xf] %v482
  %547 = vst [vmem:[%s3 + $0x2c] sm:$0xf] %v483
  %548 = vst [vmem:[%s3 + $0x30] sm:$0xf] %v484
  %549 = vst [vmem:[%s3 + $0x34] sm:$0xf] %v485
  %550 = vst [vmem:[%s3 + $0x38] sm:$0xf] %v486
  %551 = vst [vmem:[%s3 + $0x3c] sm:$0xf] %v487
  %552 = vst [vmem:[%s3 + $0x40] sm:$0xf] %v488
  %553 = vst [vmem:[%s3 + $0x44] sm:$0xf] %v489
  %554 = vst [vmem:[%s3 + $0x48] sm:$0xf] %v490
  %555 = vst [vmem:[%s3 + $0x4c] sm:$0xf] %v491
  %556 = vst [vmem:[%s3 + $0x50] sm:$0xf] %v492
  %557 = vst [vmem:[%s3 + $0x54] sm:$0xf] %v493
  %558 = vst [vmem:[%s3 + $0x58] sm:$0xf] %v494
  %559 = vst [vmem:[%s3 + $0x5c] sm:$0xf] %v495
  %560 = vst [vmem:[%s3 + $0x60] sm:$0xf] %v496
  %561 = vst [vmem:[%s3 + $0x64] sm:$0xf] %v497
  %562 = vst [vmem:[%s3 + $0x68] sm:$0xf] %v498
  %563 = vst [vmem:[%s3 + $0x6c] sm:$0xf] %v499
  %564 = vst [vmem:[%s3 + $0x70] sm:$0xf] %v500
  %565 = vst [vmem:[%s3 + $0x74] sm:$0xf] %v501
  %566 = vst [vmem:[%s3 + $0x78] sm:$0xf] %v502
  %567 = vst [vmem:[%s3 + $0x7c] sm:$0x1] %v503
  // Predicated region
  $region14: #{dummy_network_forward.2} parent=0 // pred_check
    _
  $region15: #{dummy_network_forward.2} parent=0 // pred_check_branch
    %569 = sbr.rel (0) target = $region17
  $region16: #{dummy_network_forward.2} parent=0 // pred_region
    _
  $region17: #{dummy_network_forward.2} parent=0 // pred_fallthru
    _
  // Predicated region
  $region18: #{dummy_network_forward.2} parent=0 // pred_check
    _
  $region19: #{dummy_network_forward.2} parent=0 // pred_check_branch
    %571 = sbr.rel (0) target = $region21
  $region20: #{dummy_network_forward.2} parent=0 // pred_region
    _
  $region21: #{dummy_network_forward.2} parent=0 // pred_fallthru
    _

// kernel: dummy_network_forward.3
$region0: #{dummy_network_forward.3}
  #allocation0 [shape = 'u32[]', space=smem, size = 0x4, offset = 0x4, fixed_abs, tag = 'smem constant byte address 0x4 - core index']
  #allocation1 [shape = 'u32[144,128]{1,0:T(1,128)}', space=vmem, size = 0x12000, scoped, tag = 'internal scratch']
  %s0 = inlined_call_operand.vmem [shape: bf16[16,256], index: 0, kind: input, shape index: {}]
  %s1 = inlined_call_operand.vmem [shape: bf16[256,128], index: 1, kind: input, shape index: {}]
  %s2 = inlined_call_operand.vmem [shape: f32[1,128], index: 2, kind: input, shape index: {}]
  %s3 = inlined_call_operand.vmem [shape: bf16[8,128,128], index: 3, kind: input, shape index: {}]
  %s4 = inlined_call_operand.vmem [shape: f32[1,128], index: 4, kind: input, shape index: {}]
  %s5 = inlined_call_operand.vmem [shape: bf16[128,128], index: 5, kind: input, shape index: {}]
  %s6 = inlined_call_operand.vmem [shape: f32[1,128], index: 6, kind: input, shape index: {}]
  %s7 = inlined_call_operand.vmem [shape: bf16[128,128], index: 7, kind: input, shape index: {}]
  %s8 = inlined_call_operand.vmem [shape: f32[1,128], index: 8, kind: input, shape index: {}]
  %s9 = inlined_call_operand.vmem [shape: bf16[128,128], index: 9, kind: input, shape index: {}]
  %s10 = inlined_call_operand.vmem [shape: f32[1,128], index: 10, kind: input, shape index: {}]
  %s11 = inlined_call_operand.vmem [shape: bf16[128,128], index: 11, kind: input, shape index: {}]
  %s12 = inlined_call_operand.vmem [shape: f32[1,128], index: 12, kind: input, shape index: {}]
  %s13 = inlined_call_operand.hbm [shape: f32[2,128], index: 13, kind: output, shape index: {}]
  %s14 = sld [smem:[#allocation0]]
  $region62: #{dummy_network_forward.3} parent=0
    _
  %s16 = ssub.s32 1, %s14
  %s17 = scalar_select 0, %s16, %s14
  $region1: #{dummy_network_forward.3} parent=0
    #allocation2 [shape = 'u8[1024]{0}', space=vmem, size = 0x400, scoped, tag = 'output window, operand 0, single buffered']
    #allocation3 [shape = 's32[1]{0}', space=sflag, size = 0x4, scoped, tag = 'scoped memory for dummy_network_forward.3']
    %18 = vsyncpa [#allocation3], 0
    // Predicated region
    $region2: #{dummy_network_forward.3} parent=1 // pred_check
      _
    $region3: #{dummy_network_forward.3} parent=1 // pred_check_branch
      %20 = sbr.rel (0) target = $region5
    $region4: #{dummy_network_forward.3} parent=1 // pred_region
      _
    $region5: #{dummy_network_forward.3} parent=1 // pred_fallthru
      _
    // Predicated region
    $region6: #{dummy_network_forward.3} parent=1 // pred_check
      _
    $region7: #{dummy_network_forward.3} parent=1 // pred_check_branch
      %22 = sbr.rel (0) target = $region9
    $region8: #{dummy_network_forward.3} parent=1 // pred_region
      _
    $region9: #{dummy_network_forward.3} parent=1 // pred_fallthru
      _
    // Predicated region
    $region10: #{dummy_network_forward.3} parent=1 // pred_check
      _
    $region11: #{dummy_network_forward.3} parent=1 // pred_check_branch
      %24 = sbr.rel (0) target = $region13
    $region12: #{dummy_network_forward.3} parent=1 // pred_region
      _
    $region13: #{dummy_network_forward.3} parent=1 // pred_fallthru
      _
    // Predicated region
    $region14: #{dummy_network_forward.3} parent=1 // pred_check
      _
    $region15: #{dummy_network_forward.3} parent=1 // pred_check_branch
      %26 = sbr.rel (0) target = $region17
    $region16: #{dummy_network_forward.3} parent=1 // pred_region
      _
    $region17: #{dummy_network_forward.3} parent=1 // pred_fallthru
      _
    // Predicated region
    $region18: #{dummy_network_forward.3} parent=1 // pred_check
      _
    $region19: #{dummy_network_forward.3} parent=1 // pred_check_branch
      %28 = sbr.rel (0) target = $region21
    $region20: #{dummy_network_forward.3} parent=1 // pred_region
      _
    $region21: #{dummy_network_forward.3} parent=1 // pred_fallthru
      _
    // Predicated region
    $region22: #{dummy_network_forward.3} parent=1 // pred_check
      _
    $region23: #{dummy_network_forward.3} parent=1 // pred_check_branch
      %30 = sbr.rel (0) target = $region25
    $region24: #{dummy_network_forward.3} parent=1 // pred_region
      _
    $region25: #{dummy_network_forward.3} parent=1 // pred_fallthru
      _
    // Predicated region
    $region26: #{dummy_network_forward.3} parent=1 // pred_check
      _
    $region27: #{dummy_network_forward.3} parent=1 // pred_check_branch
      %32 = sbr.rel (0) target = $region29
    $region28: #{dummy_network_forward.3} parent=1 // pred_region
      _
    $region29: #{dummy_network_forward.3} parent=1 // pred_fallthru
      _
    // Predicated region
    $region30: #{dummy_network_forward.3} parent=1 // pred_check
      _
    $region31: #{dummy_network_forward.3} parent=1 // pred_check_branch
      %34 = sbr.rel (0) target = $region33
    $region32: #{dummy_network_forward.3} parent=1 // pred_region
      _
    $region33: #{dummy_network_forward.3} parent=1 // pred_fallthru
      _
    // Predicated region
    $region34: #{dummy_network_forward.3} parent=1 // pred_check
      _
    $region35: #{dummy_network_forward.3} parent=1 // pred_check_branch
      %36 = sbr.rel (0) target = $region37
    $region36: #{dummy_network_forward.3} parent=1 // pred_region
      _
    $region37: #{dummy_network_forward.3} parent=1 // pred_fallthru
      _
    // Predicated region
    $region38: #{dummy_network_forward.3} parent=1 // pred_check
      _
    $region39: #{dummy_network_forward.3} parent=1 // pred_check_branch
      %38 = sbr.rel (0) target = $region41
    $region40: #{dummy_network_forward.3} parent=1 // pred_region
      _
    $region41: #{dummy_network_forward.3} parent=1 // pred_fallthru
      _
    // Predicated region
    $region42: #{dummy_network_forward.3} parent=1 // pred_check
      _
    $region43: #{dummy_network_forward.3} parent=1 // pred_check_branch
      %40 = sbr.rel (0) target = $region45
    $region44: #{dummy_network_forward.3} parent=1 // pred_region
      _
    $region45: #{dummy_network_forward.3} parent=1 // pred_fallthru
      _
    // Predicated region
    $region46: #{dummy_network_forward.3} parent=1 // pred_check
      _
    $region47: #{dummy_network_forward.3} parent=1 // pred_check_branch
      %42 = sbr.rel (0) target = $region49
    $region48: #{dummy_network_forward.3} parent=1 // pred_region
      _
    $region49: #{dummy_network_forward.3} parent=1 // pred_fallthru
      _
    // Predicated region
    $region50: #{dummy_network_forward.3} parent=1 // pred_check
      _
    $region51: #{dummy_network_forward.3} parent=1 // pred_check_branch
      %44 = sbr.rel (0) target = $region53
    $region52: #{dummy_network_forward.3} parent=1 // pred_region
      _
    $region53: #{dummy_network_forward.3} parent=1 // pred_fallthru
      _
    %v46 = vld [vmem:[%s0] sm:$0xff]
    %v47 = vld [vmem:[%s0 + $0x8] sm:$0xff]
    %v48 = vld [vmem:[%s1] sm:$0xf]
    %v49 = vld [vmem:[%s1 + $0x4] sm:$0xf]
    %v50 = vld [vmem:[%s1 + $0x8] sm:$0xf]
    %v51 = vld [vmem:[%s1 + $0xc] sm:$0xf]
    %v52 = vld [vmem:[%s1 + $0x10] sm:$0xf]
    %v53 = vld [vmem:[%s1 + $0x14] sm:$0xf]
    %v54 = vld [vmem:[%s1 + $0x18] sm:$0xf]
    %v55 = vld [vmem:[%s1 + $0x1c] sm:$0xf]
    %v56 = vld [vmem:[%s1 + $0x20] sm:$0xf]
    %v57 = vld [vmem:[%s1 + $0x24] sm:$0xf]
    %v58 = vld [vmem:[%s1 + $0x28] sm:$0xf]
    %v59 = vld [vmem:[%s1 + $0x2c] sm:$0xf]
    %v60 = vld [vmem:[%s1 + $0x30] sm:$0xf]
    %v61 = vld [vmem:[%s1 + $0x34] sm:$0xf]
    %v62 = vld [vmem:[%s1 + $0x38] sm:$0xf]
    %v63 = vld [vmem:[%s1 + $0x3c] sm:$0xf]
    %v64 = vld [vmem:[%s1 + $0x40] sm:$0xf]
    %v65 = vld [vmem:[%s1 + $0x44] sm:$0xf]
    %v66 = vld [vmem:[%s1 + $0x48] sm:$0xf]
    %v67 = vld [vmem:[%s1 + $0x4c] sm:$0xf]
    %v68 = vld [vmem:[%s1 + $0x50] sm:$0xf]
    %v69 = vld [vmem:[%s1 + $0x54] sm:$0xf]
    %v70 = vld [vmem:[%s1 + $0x58] sm:$0xf]
    %v71 = vld [vmem:[%s1 + $0x5c] sm:$0xf]
    %v72 = vld [vmem:[%s1 + $0x60] sm:$0xf]
    %v73 = vld [vmem:[%s1 + $0x64] sm:$0xf]
    %v74 = vld [vmem:[%s1 + $0x68] sm:$0xf]
    %v75 = vld [vmem:[%s1 + $0x6c] sm:$0xf]
    %v76 = vld [vmem:[%s1 + $0x70] sm:$0xf]
    %v77 = vld [vmem:[%s1 + $0x74] sm:$0xf]
    %v78 = vld [vmem:[%s1 + $0x78] sm:$0xf]
    %v79 = vld [vmem:[%s1 + $0x7c] sm:$0xf]
    %v80 = vld [vmem:[%s2] sm:$0x1]
    %v82 = vlaneseq
    %v83 = vshrl.u32 %v82, 7
    %v84 = vsub.s32 0, %v83
    %v85 = vrot.slane %v80, %v84
    %v89 = vunpack.c.l.b16 %v46
    %v90 = vunpack.c.h.b16 %v46
    %v91 = vunpack.c.l.b16 %v47
    %v92 = vunpack.c.h.b16 %v47
    %v93 = vpack.c.b16 %v91, %v89
    %v94 = vpack.c.b16 %v92, %v90
    %v129 = vunpack.c.l.b16 %v48
    %v130 = vunpack.c.l.b16 %v49
    %v131 = vunpack.c.l.b16 %v50
    %v132 = vunpack.c.l.b16 %v51
    %v133 = vunpack.c.l.b16 %v52
    %v134 = vunpack.c.l.b16 %v53
    %v135 = vunpack.c.l.b16 %v54
    %v136 = vunpack.c.l.b16 %v55
    %v137 = vunpack.c.l.b16 %v56
    %v138 = vunpack.c.l.b16 %v57
    %v139 = vunpack.c.l.b16 %v58
    %v140 = vunpack.c.l.b16 %v59
    %v141 = vunpack.c.l.b16 %v60
    %v142 = vunpack.c.l.b16 %v61
    %v143 = vunpack.c.l.b16 %v62
    %v144 = vunpack.c.l.b16 %v63
    %v145 = vunpack.c.l.b16 %v64
    %v146 = vunpack.c.l.b16 %v65
    %v147 = vunpack.c.l.b16 %v66
    %v148 = vunpack.c.l.b16 %v67
    %v149 = vunpack.c.l.b16 %v68
    %v150 = vunpack.c.l.b16 %v69
    %v151 = vunpack.c.l.b16 %v70
    %v152 = vunpack.c.l.b16 %v71
    %v153 = vunpack.c.l.b16 %v72
    %v154 = vunpack.c.l.b16 %v73
    %v155 = vunpack.c.l.b16 %v74
    %v156 = vunpack.c.l.b16 %v75
    %v157 = vunpack.c.l.b16 %v76
    %v158 = vunpack.c.l.b16 %v77
    %v159 = vunpack.c.l.b16 %v78
    %v160 = vunpack.c.l.b16 %v79
    %v161 = vpack.c.b16 %v130, %v129
    %v162 = vpack.c.b16 %v132, %v131
    %v163 = vpack.c.b16 %v134, %v133
    %v164 = vpack.c.b16 %v136, %v135
    %v165 = vpack.c.b16 %v138, %v137
    %v166 = vpack.c.b16 %v140, %v139
    %v167 = vpack.c.b16 %v142, %v141
    %v168 = vpack.c.b16 %v144, %v143
    %v169 = vpack.c.b16 %v146, %v145
    %v170 = vpack.c.b16 %v148, %v147
    %v171 = vpack.c.b16 %v150, %v149
    %v172 = vpack.c.b16 %v152, %v151
    %v173 = vpack.c.b16 %v154, %v153
    %v174 = vpack.c.b16 %v156, %v155
    %v175 = vpack.c.b16 %v158, %v157
    %v176 = vpack.c.b16 %v160, %v159
    %193 = vmatprep.subr.bf16.mxu0 0
    %194 = vmatpush1.bf16.msra.mxu0 %v161
    %195 = vmatprep.subr.bf16.mxu0 0
    %196 = vmatpush1.bf16.msra.mxu0 %v162
    %197 = vmatprep.subr.bf16.mxu0 0
    %198 = vmatpush1.bf16.msra.mxu0 %v163
    %199 = vmatprep.subr.bf16.mxu0 0
    %200 = vmatpush1.bf16.msra.mxu0 %v164
    %201 = vmatprep.subr.bf16.mxu0 0
    %202 = vmatpush1.bf16.msra.mxu0 %v165
    %203 = vmatprep.subr.bf16.mxu0 0
    %204 = vmatpush1.bf16.msra.mxu0 %v166
    %205 = vmatprep.subr.bf16.mxu0 0
    %206 = vmatpush1.bf16.msra.mxu0 %v167
    %207 = vmatprep.subr.bf16.mxu0 0
    %208 = vmatpush1.bf16.msra.mxu0 %v168
    %209 = vmatprep.subr.bf16.mxu0 0
    %210 = vmatpush1.bf16.msra.mxu0 %v169
    %211 = vmatprep.subr.bf16.mxu0 0
    %212 = vmatpush1.bf16.msra.mxu0 %v170
    %213 = vmatprep.subr.bf16.mxu0 0
    %214 = vmatpush1.bf16.msra.mxu0 %v171
    %215 = vmatprep.subr.bf16.mxu0 0
    %216 = vmatpush1.bf16.msra.mxu0 %v172
    %217 = vmatprep.subr.bf16.mxu0 0
    %218 = vmatpush1.bf16.msra.mxu0 %v173
    %219 = vmatprep.subr.bf16.mxu0 0
    %220 = vmatpush1.bf16.msra.mxu0 %v174
    %221 = vmatprep.subr.bf16.mxu0 0
    %222 = vmatpush1.bf16.msra.mxu0 %v175
    %223 = vmatprep.subr.bf16.mxu0 0
    %224 = vmatpush1.bf16.msra.mxu0 %v176
    %225 = vmatprep.mubr.bf16.mxu0 %v94
    %226 = vmatmul.mubr.bf16.gmra.mrb[0].mxu0 %v93
    %v227 = vpop.f32.mrb[0].mxu0
    %v228 = vadd.f32 %v85, %v227
    %v229 = vpop.f32.mrb[0].mxu0
    %v230 = vpop.f32.mrb[0].mxu0
    %v231 = vadd.f32 %v85, %v230
    %v232 = vpop.f32.mrb[0].mxu0
    %233 = vdwg.mxu0
    %v234 = vmax.f32 %v228, 0.0
    %v235 = vmax.f32 %v231, 0.0
    %v236 = vpack.c.bf16 %v235, %v234
    %v237 = vld [vmem:[%s3] sm:$0xf]
    %v238 = vld [vmem:[%s3 + $0x4] sm:$0xf]
    %v239 = vld [vmem:[%s3 + $0x8] sm:$0xf]
    %v240 = vld [vmem:[%s3 + $0xc] sm:$0xf]
    %v241 = vld [vmem:[%s3 + $0x10] sm:$0xf]
    %v242 = vld [vmem:[%s3 + $0x14] sm:$0xf]
    %v243 = vld [vmem:[%s3 + $0x18] sm:$0xf]
    %v244 = vld [vmem:[%s3 + $0x1c] sm:$0xf]
    %v245 = vld [vmem:[%s3 + $0x20] sm:$0xf]
    %v246 = vld [vmem:[%s3 + $0x24] sm:$0xf]
    %v247 = vld [vmem:[%s3 + $0x28] sm:$0xf]
    %v248 = vld [vmem:[%s3 + $0x2c] sm:$0xf]
    %v249 = vld [vmem:[%s3 + $0x30] sm:$0xf]
    %v250 = vld [vmem:[%s3 + $0x34] sm:$0xf]
    %v251 = vld [vmem:[%s3 + $0x38] sm:$0xf]
    %v252 = vld [vmem:[%s3 + $0x3c] sm:$0xf]
    %s253 = scalar_lea.vmem %s3, 64
    %v254 = vld [vmem:[%s253] sm:$0xf]
    %v255 = vld [vmem:[%s253 + $0x4] sm:$0xf]
    %v256 = vld [vmem:[%s253 + $0x8] sm:$0xf]
    %v257 = vld [vmem:[%s253 + $0xc] sm:$0xf]
    %v258 = vld [vmem:[%s253 + $0x10] sm:$0xf]
    %v259 = vld [vmem:[%s253 + $0x14] sm:$0xf]
    %v260 = vld [vmem:[%s253 + $0x18] sm:$0xf]
    %v261 = vld [vmem:[%s253 + $0x1c] sm:$0xf]
    %v262 = vld [vmem:[%s253 + $0x20] sm:$0xf]
    %v263 = vld [vmem:[%s253 + $0x24] sm:$0xf]
    %v264 = vld [vmem:[%s253 + $0x28] sm:$0xf]
    %v265 = vld [vmem:[%s253 + $0x2c] sm:$0xf]
    %v266 = vld [vmem:[%s253 + $0x30] sm:$0xf]
    %v267 = vld [vmem:[%s253 + $0x34] sm:$0xf]
    %v268 = vld [vmem:[%s253 + $0x38] sm:$0xf]
    %v269 = vld [vmem:[%s253 + $0x3c] sm:$0xf]
    %v271 = vrot.slane %v236, 1
    %v289 = vunpack.c.l.b16 %v254
    %v290 = vunpack.c.l.b16 %v255
    %v291 = vunpack.c.l.b16 %v256
    %v292 = vunpack.c.l.b16 %v257
    %v293 = vunpack.c.l.b16 %v258
    %v294 = vunpack.c.l.b16 %v259
    %v295 = vunpack.c.l.b16 %v260
    %v296 = vunpack.c.l.b16 %v261
    %v297 = vunpack.c.l.b16 %v262
    %v298 = vunpack.c.l.b16 %v263
    %v299 = vunpack.c.l.b16 %v264
    %v300 = vunpack.c.l.b16 %v265
    %v301 = vunpack.c.l.b16 %v266
    %v302 = vunpack.c.l.b16 %v267
    %v303 = vunpack.c.l.b16 %v268
    %v304 = vunpack.c.l.b16 %v269
    %v305 = vpack.c.b16 %v290, %v289
    %v306 = vpack.c.b16 %v292, %v291
    %v307 = vpack.c.b16 %v294, %v293
    %v308 = vpack.c.b16 %v296, %v295
    %v309 = vpack.c.b16 %v298, %v297
    %v310 = vpack.c.b16 %v300, %v299
    %v311 = vpack.c.b16 %v302, %v301
    %v312 = vpack.c.b16 %v304, %v303
    %321 = vmatprep.subr.bf16.mxu0 0
    %322 = vmatpush1.bf16.msra.mxu0 %v305
    %323 = vmatprep.subr.bf16.mxu0 0
    %324 = vmatpush1.bf16.msra.mxu0 %v306
    %325 = vmatprep.subr.bf16.mxu0 0
    %326 = vmatpush1.bf16.msra.mxu0 %v307
    %327 = vmatprep.subr.bf16.mxu0 0
    %328 = vmatpush1.bf16.msra.mxu0 %v308
    %329 = vmatprep.subr.bf16.mxu0 0
    %330 = vmatpush1.bf16.msra.mxu0 %v309
    %331 = vmatprep.subr.bf16.mxu0 0
    %332 = vmatpush1.bf16.msra.mxu0 %v310
    %333 = vmatprep.subr.bf16.mxu0 0
    %334 = vmatpush1.bf16.msra.mxu0 %v311
    %335 = vmatprep.subr.bf16.mxu0 0
    %336 = vmatpush1.bf16.msra.mxu0 %v312
    %337 = vmatprep.subr.bf16.mxu0 0
    %338 = vmatpush1.bf16.msra.mxu0 0
    %339 = vmatprep.subr.bf16.mxu0 0
    %340 = vmatpush1.bf16.msra.mxu0 0
    %341 = vmatprep.subr.bf16.mxu0 0
    %342 = vmatpush1.bf16.msra.mxu0 0
    %343 = vmatprep.subr.bf16.mxu0 0
    %344 = vmatpush1.bf16.msra.mxu0 0
    %345 = vmatprep.subr.bf16.mxu0 0
    %346 = vmatpush1.bf16.msra.mxu0 0
    %347 = vmatprep.subr.bf16.mxu0 0
    %348 = vmatpush1.bf16.msra.mxu0 0
    %349 = vmatprep.subr.bf16.mxu0 0
    %350 = vmatpush1.bf16.msra.mxu0 0
    %351 = vmatprep.subr.bf16.mxu0 0
    %352 = vmatpush1.bf16.msra.mxu0 0
    %353 = vmatprep.mubr.bf16.mxu0 0
    %354 = vmatmul.mubr.bf16.gmra.mrb[0].mxu0 %v271
    %v355 = vpop.f32.mrb[0].mxu0
    %v356 = vadd.f32 0.0, %v355
    %v357 = vpop.f32.mrb[0].mxu0
    %v358 = vpop.f32.mrb[0].mxu0
    %v359 = vpop.f32.mrb[0].mxu0
    %360 = vdwg.mxu0
    %v377 = vunpack.c.l.b16 %v237
    %v378 = vunpack.c.l.b16 %v238
    %v379 = vunpack.c.l.b16 %v239
    %v380 = vunpack.c.l.b16 %v240
    %v381 = vunpack.c.l.b16 %v241
    %v382 = vunpack.c.l.b16 %v242
    %v383 = vunpack.c.l.b16 %v243
    %v384 = vunpack.c.l.b16 %v244
    %v385 = vunpack.c.l.b16 %v245
    %v386 = vunpack.c.l.b16 %v246
    %v387 = vunpack.c.l.b16 %v247
    %v388 = vunpack.c.l.b16 %v248
    %v389 = vunpack.c.l.b16 %v249
    %v390 = vunpack.c.l.b16 %v250
    %v391 = vunpack.c.l.b16 %v251
    %v392 = vunpack.c.l.b16 %v252
    %v393 = vpack.c.b16 %v378, %v377
    %v394 = vpack.c.b16 %v380, %v379
    %v395 = vpack.c.b16 %v382, %v381
    %v396 = vpack.c.b16 %v384, %v383
    %v397 = vpack.c.b16 %v386, %v385
    %v398 = vpack.c.b16 %v388, %v387
    %v399 = vpack.c.b16 %v390, %v389
    %v400 = vpack.c.b16 %v392, %v391
    %409 = vmatprep.subr.bf16.mxu0 0
    %410 = vmatpush1.bf16.msra.mxu0 %v393
    %411 = vmatprep.subr.bf16.mxu0 0
    %412 = vmatpush1.bf16.msra.mxu0 %v394
    %413 = vmatprep.subr.bf16.mxu0 0
    %414 = vmatpush1.bf16.msra.mxu0 %v395
    %415 = vmatprep.subr.bf16.mxu0 0
    %416 = vmatpush1.bf16.msra.mxu0 %v396
    %417 = vmatprep.subr.bf16.mxu0 0
    %418 = vmatpush1.bf16.msra.mxu0 %v397
    %419 = vmatprep.subr.bf16.mxu0 0
    %420 = vmatpush1.bf16.msra.mxu0 %v398
    %421 = vmatprep.subr.bf16.mxu0 0
    %422 = vmatpush1.bf16.msra.mxu0 %v399
    %423 = vmatprep.subr.bf16.mxu0 0
    %424 = vmatpush1.bf16.msra.mxu0 %v400
    %425 = vmatprep.subr.bf16.mxu0 0
    %426 = vmatpush1.bf16.msra.mxu0 0
    %427 = vmatprep.subr.bf16.mxu0 0
    %428 = vmatpush1.bf16.msra.mxu0 0
    %429 = vmatprep.subr.bf16.mxu0 0
    %430 = vmatpush1.bf16.msra.mxu0 0
    %431 = vmatprep.subr.bf16.mxu0 0
    %432 = vmatpush1.bf16.msra.mxu0 0
    %433 = vmatprep.subr.bf16.mxu0 0
    %434 = vmatpush1.bf16.msra.mxu0 0
    %435 = vmatprep.subr.bf16.mxu0 0
    %436 = vmatpush1.bf16.msra.mxu0 0
    %437 = vmatprep.subr.bf16.mxu0 0
    %438 = vmatpush1.bf16.msra.mxu0 0
    %439 = vmatprep.subr.bf16.mxu0 0
    %440 = vmatpush1.bf16.msra.mxu0 0
    %441 = vmatprep.mubr.bf16.mxu0 0
    %442 = vmatmul.mubr.bf16.gmra.mrb[0].mxu0 %v236
    %v443 = vpop.f32.mrb[0].mxu0
    %v444 = vadd.f32 %v356, %v443
    %v445 = vpop.f32.mrb[0].mxu0
    %v446 = vpop.f32.mrb[0].mxu0
    %v447 = vpop.f32.mrb[0].mxu0
    %448 = vdwg.mxu0
    %s449 = scalar_lea.vmem %s3, 128
    %v450 = vld [vmem:[%s449] sm:$0xf]
    %v451 = vld [vmem:[%s449 + $0x4] sm:$0xf]
    %v452 = vld [vmem:[%s449 + $0x8] sm:$0xf]
    %v453 = vld [vmem:[%s449 + $0xc] sm:$0xf]
    %v454 = vld [vmem:[%s449 + $0x10] sm:$0xf]
    %v455 = vld [vmem:[%s449 + $0x14] sm:$0xf]
    %v456 = vld [vmem:[%s449 + $0x18] sm:$0xf]
    %v457 = vld [vmem:[%s449 + $0x1c] sm:$0xf]
    %v458 = vld [vmem:[%s449 + $0x20] sm:$0xf]
    %v459 = vld [vmem:[%s449 + $0x24] sm:$0xf]
    %v460 = vld [vmem:[%s449 + $0x28] sm:$0xf]
    %v461 = vld [vmem:[%s449 + $0x2c] sm:$0xf]
    %v462 = vld [vmem:[%s449 + $0x30] sm:$0xf]
    %v463 = vld [vmem:[%s449 + $0x34] sm:$0xf]
    %v464 = vld [vmem:[%s449 + $0x38] sm:$0xf]
    %v465 = vld [vmem:[%s449 + $0x3c] sm:$0xf]
    %v466 = vrot.slane %v236, 2
    %v484 = vunpack.c.l.b16 %v450
    %v485 = vunpack.c.l.b16 %v451
    %v486 = vunpack.c.l.b16 %v452
    %v487 = vunpack.c.l.b16 %v453
    %v488 = vunpack.c.l.b16 %v454
    %v489 = vunpack.c.l.b16 %v455
    %v490 = vunpack.c.l.b16 %v456
    %v491 = vunpack.c.l.b16 %v457
    %v492 = vunpack.c.l.b16 %v458
    %v493 = vunpack.c.l.b16 %v459
    %v494 = vunpack.c.l.b16 %v460
    %v495 = vunpack.c.l.b16 %v461
    %v496 = vunpack.c.l.b16 %v462
    %v497 = vunpack.c.l.b16 %v463
    %v498 = vunpack.c.l.b16 %v464
    %v499 = vunpack.c.l.b16 %v465
    %v500 = vpack.c.b16 %v485, %v484
    %v501 = vpack.c.b16 %v487, %v486
    %v502 = vpack.c.b16 %v489, %v488
    %v503 = vpack.c.b16 %v491, %v490
    %v504 = vpack.c.b16 %v493, %v492
    %v505 = vpack.c.b16 %v495, %v494
    %v506 = vpack.c.b16 %v497, %v496
    %v507 = vpack.c.b16 %v499, %v498
    %516 = vmatprep.subr.bf16.mxu0 0
    %517 = vmatpush1.bf16.msra.mxu0 %v500
    %518 = vmatprep.subr.bf16.mxu0 0
    %519 = vmatpush1.bf16.msra.mxu0 %v501
    %520 = vmatprep.subr.bf16.mxu0 0
    %521 = vmatpush1.bf16.msra.mxu0 %v502
    %522 = vmatprep.subr.bf16.mxu0 0
    %523 = vmatpush1.bf16.msra.mxu0 %v503
    %524 = vmatprep.subr.bf16.mxu0 0
    %525 = vmatpush1.bf16.msra.mxu0 %v504
    %526 = vmatprep.subr.bf16.mxu0 0
    %527 = vmatpush1.bf16.msra.mxu0 %v505
    %528 = vmatprep.subr.bf16.mxu0 0
    %529 = vmatpush1.bf16.msra.mxu0 %v506
    %530 = vmatprep.subr.bf16.mxu0 0
    %531 = vmatpush1.bf16.msra.mxu0 %v507
    %532 = vmatprep.subr.bf16.mxu0 0
    %533 = vmatpush1.bf16.msra.mxu0 0
    %534 = vmatprep.subr.bf16.mxu0 0
    %535 = vmatpush1.bf16.msra.mxu0 0
    %536 = vmatprep.subr.bf16.mxu0 0
    %537 = vmatpush1.bf16.msra.mxu0 0
    %538 = vmatprep.subr.bf16.mxu0 0
    %539 = vmatpush1.bf16.msra.mxu0 0
    %540 = vmatprep.subr.bf16.mxu0 0
    %541 = vmatpush1.bf16.msra.mxu0 0
    %542 = vmatprep.subr.bf16.mxu0 0
    %543 = vmatpush1.bf16.msra.mxu0 0
    %544 = vmatprep.subr.bf16.mxu0 0
    %545 = vmatpush1.bf16.msra.mxu0 0
    %546 = vmatprep.subr.bf16.mxu0 0
    %547 = vmatpush1.bf16.msra.mxu0 0
    %548 = vmatprep.mubr.bf16.mxu0 0
    %549 = vmatmul.mubr.bf16.gmra.mrb[0].mxu0 %v466
    %v550 = vpop.f32.mrb[0].mxu0
    %v551 = vadd.f32 0.0, %v550
    %v552 = vpop.f32.mrb[0].mxu0
    %v553 = vpop.f32.mrb[0].mxu0
    %v554 = vpop.f32.mrb[0].mxu0
    %555 = vdwg.mxu0
    %v556 = vadd.f32 %v444, %v551
    %s557 = scalar_lea.vmem %s3, 192
    %v558 = vld [vmem:[%s557] sm:$0xf]
    %v559 = vld [vmem:[%s557 + $0x4] sm:$0xf]
    %v560 = vld [vmem:[%s557 + $0x8] sm:$0xf]
    %v561 = vld [vmem:[%s557 + $0xc] sm:$0xf]
    %v562 = vld [vmem:[%s557 + $0x10] sm:$0xf]
    %v563 = vld [vmem:[%s557 + $0x14] sm:$0xf]
    %v564 = vld [vmem:[%s557 + $0x18] sm:$0xf]
    %v565 = vld [vmem:[%s557 + $0x1c] sm:$0xf]
    %v566 = vld [vmem:[%s557 + $0x20] sm:$0xf]
    %v567 = vld [vmem:[%s557 + $0x24] sm:$0xf]
    %v568 = vld [vmem:[%s557 + $0x28] sm:$0xf]
    %v569 = vld [vmem:[%s557 + $0x2c] sm:$0xf]
    %v570 = vld [vmem:[%s557 + $0x30] sm:$0xf]
    %v571 = vld [vmem:[%s557 + $0x34] sm:$0xf]
    %v572 = vld [vmem:[%s557 + $0x38] sm:$0xf]
    %v573 = vld [vmem:[%s557 + $0x3c] sm:$0xf]
    %v574 = vrot.slane %v236, 3
    %v592 = vunpack.c.l.b16 %v558
    %v593 = vunpack.c.l.b16 %v559
    %v594 = vunpack.c.l.b16 %v560
    %v595 = vunpack.c.l.b16 %v561
    %v596 = vunpack.c.l.b16 %v562
    %v597 = vunpack.c.l.b16 %v563
    %v598 = vunpack.c.l.b16 %v564
    %v599 = vunpack.c.l.b16 %v565
    %v600 = vunpack.c.l.b16 %v566
    %v601 = vunpack.c.l.b16 %v567
    %v602 = vunpack.c.l.b16 %v568
    %v603 = vunpack.c.l.b16 %v569
    %v604 = vunpack.c.l.b16 %v570
    %v605 = vunpack.c.l.b16 %v571
    %v606 = vunpack.c.l.b16 %v572
    %v607 = vunpack.c.l.b16 %v573
    %v608 = vpack.c.b16 %v593, %v592
    %v609 = vpack.c.b16 %v595, %v594
    %v610 = vpack.c.b16 %v597, %v596
    %v611 = vpack.c.b16 %v599, %v598
    %v612 = vpack.c.b16 %v601, %v600
    %v613 = vpack.c.b16 %v603, %v602
    %v614 = vpack.c.b16 %v605, %v604
    %v615 = vpack.c.b16 %v607, %v606
    %624 = vmatprep.subr.bf16.mxu0 0
    %625 = vmatpush1.bf16.msra.mxu0 %v608
    %626 = vmatprep.subr.bf16.mxu0 0
    %627 = vmatpush1.bf16.msra.mxu0 %v609
    %628 = vmatprep.subr.bf16.mxu0 0
    %629 = vmatpush1.bf16.msra.mxu0 %v610
    %630 = vmatprep.subr.bf16.mxu0 0
    %631 = vmatpush1.bf16.msra.mxu0 %v611
    %632 = vmatprep.subr.bf16.mxu0 0
    %633 = vmatpush1.bf16.msra.mxu0 %v612
    %634 = vmatprep.subr.bf16.mxu0 0
    %635 = vmatpush1.bf16.msra.mxu0 %v613
    %636 = vmatprep.subr.bf16.mxu0 0
    %637 = vmatpush1.bf16.msra.mxu0 %v614
    %638 = vmatprep.subr.bf16.mxu0 0
    %639 = vmatpush1.bf16.msra.mxu0 %v615
    %640 = vmatprep.subr.bf16.mxu0 0
    %641 = vmatpush1.bf16.msra.mxu0 0
    %642 = vmatprep.subr.bf16.mxu0 0
    %643 = vmatpush1.bf16.msra.mxu0 0
    %644 = vmatprep.subr.bf16.mxu0 0
    %645 = vmatpush1.bf16.msra.mxu0 0
    %646 = vmatprep.subr.bf16.mxu0 0
    %647 = vmatpush1.bf16.msra.mxu0 0
    %648 = vmatprep.subr.bf16.mxu0 0
    %649 = vmatpush1.bf16.msra.mxu0 0
    %650 = vmatprep.subr.bf16.mxu0 0
    %651 = vmatpush1.bf16.msra.mxu0 0
    %652 = vmatprep.subr.bf16.mxu0 0
    %653 = vmatpush1.bf16.msra.mxu0 0
    %654 = vmatprep.subr.bf16.mxu0 0
    %655 = vmatpush1.bf16.msra.mxu0 0
    %656 = vmatprep.mubr.bf16.mxu0 0
    %657 = vmatmul.mubr.bf16.gmra.mrb[0].mxu0 %v574
    %v658 = vpop.f32.mrb[0].mxu0
    %v659 = vadd.f32 0.0, %v658
    %v660 = vpop.f32.mrb[0].mxu0
    %v661 = vpop.f32.mrb[0].mxu0
    %v662 = vpop.f32.mrb[0].mxu0
    %663 = vdwg.mxu0
    %v664 = vadd.f32 %v556, %v659
    %s665 = scalar_lea.vmem %s3, 256
    %v666 = vld [vmem:[%s665] sm:$0xf]
    %v667 = vld [vmem:[%s665 + $0x4] sm:$0xf]
    %v668 = vld [vmem:[%s665 + $0x8] sm:$0xf]
    %v669 = vld [vmem:[%s665 + $0xc] sm:$0xf]
    %v670 = vld [vmem:[%s665 + $0x10] sm:$0xf]
    %v671 = vld [vmem:[%s665 + $0x14] sm:$0xf]
    %v672 = vld [vmem:[%s665 + $0x18] sm:$0xf]
    %v673 = vld [vmem:[%s665 + $0x1c] sm:$0xf]
    %v674 = vld [vmem:[%s665 + $0x20] sm:$0xf]
    %v675 = vld [vmem:[%s665 + $0x24] sm:$0xf]
    %v676 = vld [vmem:[%s665 + $0x28] sm:$0xf]
    %v677 = vld [vmem:[%s665 + $0x2c] sm:$0xf]
    %v678 = vld [vmem:[%s665 + $0x30] sm:$0xf]
    %v679 = vld [vmem:[%s665 + $0x34] sm:$0xf]
    %v680 = vld [vmem:[%s665 + $0x38] sm:$0xf]
    %v681 = vld [vmem:[%s665 + $0x3c] sm:$0xf]
    %v682 = vrot.slane %v236, 4
    %v700 = vunpack.c.l.b16 %v666
    %v701 = vunpack.c.l.b16 %v667
    %v702 = vunpack.c.l.b16 %v668
    %v703 = vunpack.c.l.b16 %v669
    %v704 = vunpack.c.l.b16 %v670
    %v705 = vunpack.c.l.b16 %v671
    %v706 = vunpack.c.l.b16 %v672
    %v707 = vunpack.c.l.b16 %v673
    %v708 = vunpack.c.l.b16 %v674
    %v709 = vunpack.c.l.b16 %v675
    %v710 = vunpack.c.l.b16 %v676
    %v711 = vunpack.c.l.b16 %v677
    %v712 = vunpack.c.l.b16 %v678
    %v713 = vunpack.c.l.b16 %v679
    %v714 = vunpack.c.l.b16 %v680
    %v715 = vunpack.c.l.b16 %v681
    %v716 = vpack.c.b16 %v701, %v700
    %v717 = vpack.c.b16 %v703, %v702
    %v718 = vpack.c.b16 %v705, %v704
    %v719 = vpack.c.b16 %v707, %v706
    %v720 = vpack.c.b16 %v709, %v708
    %v721 = vpack.c.b16 %v711, %v710
    %v722 = vpack.c.b16 %v713, %v712
    %v723 = vpack.c.b16 %v715, %v714
    %732 = vmatprep.subr.bf16.mxu0 0
    %733 = vmatpush1.bf16.msra.mxu0 %v716
    %734 = vmatprep.subr.bf16.mxu0 0
    %735 = vmatpush1.bf16.msra.mxu0 %v717
    %736 = vmatprep.subr.bf16.mxu0 0
    %737 = vmatpush1.bf16.msra.mxu0 %v718
    %738 = vmatprep.subr.bf16.mxu0 0
    %739 = vmatpush1.bf16.msra.mxu0 %v719
    %740 = vmatprep.subr.bf16.mxu0 0
    %741 = vmatpush1.bf16.msra.mxu0 %v720
    %742 = vmatprep.subr.bf16.mxu0 0
    %743 = vmatpush1.bf16.msra.mxu0 %v721
    %744 = vmatprep.subr.bf16.mxu0 0
    %745 = vmatpush1.bf16.msra.mxu0 %v722
    %746 = vmatprep.subr.bf16.mxu0 0
    %747 = vmatpush1.bf16.msra.mxu0 %v723
    %748 = vmatprep.subr.bf16.mxu0 0
    %749 = vmatpush1.bf16.msra.mxu0 0
    %750 = vmatprep.subr.bf16.mxu0 0
    %751 = vmatpush1.bf16.msra.mxu0 0
    %752 = vmatprep.subr.bf16.mxu0 0
    %753 = vmatpush1.bf16.msra.mxu0 0
    %754 = vmatprep.subr.bf16.mxu0 0
    %755 = vmatpush1.bf16.msra.mxu0 0
    %756 = vmatprep.subr.bf16.mxu0 0
    %757 = vmatpush1.bf16.msra.mxu0 0
    %758 = vmatprep.subr.bf16.mxu0 0
    %759 = vmatpush1.bf16.msra.mxu0 0
    %760 = vmatprep.subr.bf16.mxu0 0
    %761 = vmatpush1.bf16.msra.mxu0 0
    %762 = vmatprep.subr.bf16.mxu0 0
    %763 = vmatpush1.bf16.msra.mxu0 0
    %764 = vmatprep.mubr.bf16.mxu0 0
    %765 = vmatmul.mubr.bf16.gmra.mrb[0].mxu0 %v682
    %v766 = vpop.f32.mrb[0].mxu0
    %v767 = vadd.f32 0.0, %v766
    %v768 = vpop.f32.mrb[0].mxu0
    %v769 = vpop.f32.mrb[0].mxu0
    %v770 = vpop.f32.mrb[0].mxu0
    %771 = vdwg.mxu0
    %v772 = vadd.f32 %v664, %v767
    %s773 = scalar_lea.vmem %s3, 320
    %v774 = vld [vmem:[%s773] sm:$0xf]
    %v775 = vld [vmem:[%s773 + $0x4] sm:$0xf]
    %v776 = vld [vmem:[%s773 + $0x8] sm:$0xf]
    %v777 = vld [vmem:[%s773 + $0xc] sm:$0xf]
    %v778 = vld [vmem:[%s773 + $0x10] sm:$0xf]
    %v779 = vld [vmem:[%s773 + $0x14] sm:$0xf]
    %v780 = vld [vmem:[%s773 + $0x18] sm:$0xf]
    %v781 = vld [vmem:[%s773 + $0x1c] sm:$0xf]
    %v782 = vld [vmem:[%s773 + $0x20] sm:$0xf]
    %v783 = vld [vmem:[%s773 + $0x24] sm:$0xf]
    %v784 = vld [vmem:[%s773 + $0x28] sm:$0xf]
    %v785 = vld [vmem:[%s773 + $0x2c] sm:$0xf]
    %v786 = vld [vmem:[%s773 + $0x30] sm:$0xf]
    %v787 = vld [vmem:[%s773 + $0x34] sm:$0xf]
    %v788 = vld [vmem:[%s773 + $0x38] sm:$0xf]
    %v789 = vld [vmem:[%s773 + $0x3c] sm:$0xf]
    %v790 = vrot.slane %v236, 5
    %v808 = vunpack.c.l.b16 %v774
    %v809 = vunpack.c.l.b16 %v775
    %v810 = vunpack.c.l.b16 %v776
    %v811 = vunpack.c.l.b16 %v777
    %v812 = vunpack.c.l.b16 %v778
    %v813 = vunpack.c.l.b16 %v779
    %v814 = vunpack.c.l.b16 %v780
    %v815 = vunpack.c.l.b16 %v781
    %v816 = vunpack.c.l.b16 %v782
    %v817 = vunpack.c.l.b16 %v783
    %v818 = vunpack.c.l.b16 %v784
    %v819 = vunpack.c.l.b16 %v785
    %v820 = vunpack.c.l.b16 %v786
    %v821 = vunpack.c.l.b16 %v787
    %v822 = vunpack.c.l.b16 %v788
    %v823 = vunpack.c.l.b16 %v789
    %v824 = vpack.c.b16 %v809, %v808
    %v825 = vpack.c.b16 %v811, %v810
    %v826 = vpack.c.b16 %v813, %v812
    %v827 = vpack.c.b16 %v815, %v814
    %v828 = vpack.c.b16 %v817, %v816
    %v829 = vpack.c.b16 %v819, %v818
    %v830 = vpack.c.b16 %v821, %v820
    %v831 = vpack.c.b16 %v823, %v822
    %840 = vmatprep.subr.bf16.mxu0 0
    %841 = vmatpush1.bf16.msra.mxu0 %v824
    %842 = vmatprep.subr.bf16.mxu0 0
    %843 = vmatpush1.bf16.msra.mxu0 %v825
    %844 = vmatprep.subr.bf16.mxu0 0
    %845 = vmatpush1.bf16.msra.mxu0 %v826
    %846 = vmatprep.subr.bf16.mxu0 0
    %847 = vmatpush1.bf16.msra.mxu0 %v827
    %848 = vmatprep.subr.bf16.mxu0 0
    %849 = vmatpush1.bf16.msra.mxu0 %v828
    %850 = vmatprep.subr.bf16.mxu0 0
    %851 = vmatpush1.bf16.msra.mxu0 %v829
    %852 = vmatprep.subr.bf16.mxu0 0
    %853 = vmatpush1.bf16.msra.mxu0 %v830
    %854 = vmatprep.subr.bf16.mxu0 0
    %855 = vmatpush1.bf16.msra.mxu0 %v831
    %856 = vmatprep.subr.bf16.mxu0 0
    %857 = vmatpush1.bf16.msra.mxu0 0
    %858 = vmatprep.subr.bf16.mxu0 0
    %859 = vmatpush1.bf16.msra.mxu0 0
    %860 = vmatprep.subr.bf16.mxu0 0
    %861 = vmatpush1.bf16.msra.mxu0 0
    %862 = vmatprep.subr.bf16.mxu0 0
    %863 = vmatpush1.bf16.msra.mxu0 0
    %864 = vmatprep.subr.bf16.mxu0 0
    %865 = vmatpush1.bf16.msra.mxu0 0
    %866 = vmatprep.subr.bf16.mxu0 0
    %867 = vmatpush1.bf16.msra.mxu0 0
    %868 = vmatprep.subr.bf16.mxu0 0
    %869 = vmatpush1.bf16.msra.mxu0 0
    %870 = vmatprep.subr.bf16.mxu0 0
    %871 = vmatpush1.bf16.msra.mxu0 0
    %872 = vmatprep.mubr.bf16.mxu0 0
    %873 = vmatmul.mubr.bf16.gmra.mrb[0].mxu0 %v790
    %v874 = vpop.f32.mrb[0].mxu0
    %v875 = vadd.f32 0.0, %v874
    %v876 = vpop.f32.mrb[0].mxu0
    %v877 = vpop.f32.mrb[0].mxu0
    %v878 = vpop.f32.mrb[0].mxu0
    %879 = vdwg.mxu0
    %v880 = vadd.f32 %v772, %v875
    %s881 = scalar_lea.vmem %s3, 384
    %v882 = vld [vmem:[%s881] sm:$0xf]
    %v883 = vld [vmem:[%s881 + $0x4] sm:$0xf]
    %v884 = vld [vmem:[%s881 + $0x8] sm:$0xf]
    %v885 = vld [vmem:[%s881 + $0xc] sm:$0xf]
    %v886 = vld [vmem:[%s881 + $0x10] sm:$0xf]
    %v887 = vld [vmem:[%s881 + $0x14] sm:$0xf]
    %v888 = vld [vmem:[%s881 + $0x18] sm:$0xf]
    %v889 = vld [vmem:[%s881 + $0x1c] sm:$0xf]
    %v890 = vld [vmem:[%s881 + $0x20] sm:$0xf]
    %v891 = vld [vmem:[%s881 + $0x24] sm:$0xf]
    %v892 = vld [vmem:[%s881 + $0x28] sm:$0xf]
    %v893 = vld [vmem:[%s881 + $0x2c] sm:$0xf]
    %v894 = vld [vmem:[%s881 + $0x30] sm:$0xf]
    %v895 = vld [vmem:[%s881 + $0x34] sm:$0xf]
    %v896 = vld [vmem:[%s881 + $0x38] sm:$0xf]
    %v897 = vld [vmem:[%s881 + $0x3c] sm:$0xf]
    %v898 = vrot.slane %v236, 6
    %v916 = vunpack.c.l.b16 %v882
    %v917 = vunpack.c.l.b16 %v883
    %v918 = vunpack.c.l.b16 %v884
    %v919 = vunpack.c.l.b16 %v885
    %v920 = vunpack.c.l.b16 %v886
    %v921 = vunpack.c.l.b16 %v887
    %v922 = vunpack.c.l.b16 %v888
    %v923 = vunpack.c.l.b16 %v889
    %v924 = vunpack.c.l.b16 %v890
    %v925 = vunpack.c.l.b16 %v891
    %v926 = vunpack.c.l.b16 %v892
    %v927 = vunpack.c.l.b16 %v893
    %v928 = vunpack.c.l.b16 %v894
    %v929 = vunpack.c.l.b16 %v895
    %v930 = vunpack.c.l.b16 %v896
    %v931 = vunpack.c.l.b16 %v897
    %v932 = vpack.c.b16 %v917, %v916
    %v933 = vpack.c.b16 %v919, %v918
    %v934 = vpack.c.b16 %v921, %v920
    %v935 = vpack.c.b16 %v923, %v922
    %v936 = vpack.c.b16 %v925, %v924
    %v937 = vpack.c.b16 %v927, %v926
    %v938 = vpack.c.b16 %v929, %v928
    %v939 = vpack.c.b16 %v931, %v930
    %948 = vmatprep.subr.bf16.mxu0 0
    %949 = vmatpush1.bf16.msra.mxu0 %v932
    %950 = vmatprep.subr.bf16.mxu0 0
    %951 = vmatpush1.bf16.msra.mxu0 %v933
    %952 = vmatprep.subr.bf16.mxu0 0
    %953 = vmatpush1.bf16.msra.mxu0 %v934
    %954 = vmatprep.subr.bf16.mxu0 0
    %955 = vmatpush1.bf16.msra.mxu0 %v935
    %956 = vmatprep.subr.bf16.mxu0 0
    %957 = vmatpush1.bf16.msra.mxu0 %v936
    %958 = vmatprep.subr.bf16.mxu0 0
    %959 = vmatpush1.bf16.msra.mxu0 %v937
    %960 = vmatprep.subr.bf16.mxu0 0
    %961 = vmatpush1.bf16.msra.mxu0 %v938
    %962 = vmatprep.subr.bf16.mxu0 0
    %963 = vmatpush1.bf16.msra.mxu0 %v939
    %964 = vmatprep.subr.bf16.mxu0 0
    %965 = vmatpush1.bf16.msra.mxu0 0
    %966 = vmatprep.subr.bf16.mxu0 0
    %967 = vmatpush1.bf16.msra.mxu0 0
    %968 = vmatprep.subr.bf16.mxu0 0
    %969 = vmatpush1.bf16.msra.mxu0 0
    %970 = vmatprep.subr.bf16.mxu0 0
    %971 = vmatpush1.bf16.msra.mxu0 0
    %972 = vmatprep.subr.bf16.mxu0 0
    %973 = vmatpush1.bf16.msra.mxu0 0
    %974 = vmatprep.subr.bf16.mxu0 0
    %975 = vmatpush1.bf16.msra.mxu0 0
    %976 = vmatprep.subr.bf16.mxu0 0
    %977 = vmatpush1.bf16.msra.mxu0 0
    %978 = vmatprep.subr.bf16.mxu0 0
    %979 = vmatpush1.bf16.msra.mxu0 0
    %980 = vmatprep.mubr.bf16.mxu0 0
    %981 = vmatmul.mubr.bf16.gmra.mrb[0].mxu0 %v898
    %v982 = vpop.f32.mrb[0].mxu0
    %v983 = vadd.f32 0.0, %v982
    %v984 = vpop.f32.mrb[0].mxu0
    %v985 = vpop.f32.mrb[0].mxu0
    %v986 = vpop.f32.mrb[0].mxu0
    %987 = vdwg.mxu0
    %v988 = vadd.f32 %v880, %v983
    %s989 = scalar_lea.vmem %s3, 448
    %v990 = vld [vmem:[%s989] sm:$0xf]
    %v991 = vld [vmem:[%s989 + $0x4] sm:$0xf]
    %v992 = vld [vmem:[%s989 + $0x8] sm:$0xf]
    %v993 = vld [vmem:[%s989 + $0xc] sm:$0xf]
    %v994 = vld [vmem:[%s989 + $0x10] sm:$0xf]
    %v995 = vld [vmem:[%s989 + $0x14] sm:$0xf]
    %v996 = vld [vmem:[%s989 + $0x18] sm:$0xf]
    %v997 = vld [vmem:[%s989 + $0x1c] sm:$0xf]
    %v998 = vld [vmem:[%s989 + $0x20] sm:$0xf]
    %v999 = vld [vmem:[%s989 + $0x24] sm:$0xf]
    %v1000 = vld [vmem:[%s989 + $0x28] sm:$0xf]
    %v1001 = vld [vmem:[%s989 + $0x2c] sm:$0xf]
    %v1002 = vld [vmem:[%s989 + $0x30] sm:$0xf]
    %v1003 = vld [vmem:[%s989 + $0x34] sm:$0xf]
    %v1004 = vld [vmem:[%s989 + $0x38] sm:$0xf]
    %v1005 = vld [vmem:[%s989 + $0x3c] sm:$0xf]
    %v1006 = vrot.slane %v236, 7
    %v1024 = vunpack.c.l.b16 %v990
    %v1025 = vunpack.c.l.b16 %v991
    %v1026 = vunpack.c.l.b16 %v992
    %v1027 = vunpack.c.l.b16 %v993
    %v1028 = vunpack.c.l.b16 %v994
    %v1029 = vunpack.c.l.b16 %v995
    %v1030 = vunpack.c.l.b16 %v996
    %v1031 = vunpack.c.l.b16 %v997
    %v1032 = vunpack.c.l.b16 %v998
    %v1033 = vunpack.c.l.b16 %v999
    %v1034 = vunpack.c.l.b16 %v1000
    %v1035 = vunpack.c.l.b16 %v1001
    %v1036 = vunpack.c.l.b16 %v1002
    %v1037 = vunpack.c.l.b16 %v1003
    %v1038 = vunpack.c.l.b16 %v1004
    %v1039 = vunpack.c.l.b16 %v1005
    %v1040 = vpack.c.b16 %v1025, %v1024
    %v1041 = vpack.c.b16 %v1027, %v1026
    %v1042 = vpack.c.b16 %v1029, %v1028
    %v1043 = vpack.c.b16 %v1031, %v1030
    %v1044 = vpack.c.b16 %v1033, %v1032
    %v1045 = vpack.c.b16 %v1035, %v1034
    %v1046 = vpack.c.b16 %v1037, %v1036
    %v1047 = vpack.c.b16 %v1039, %v1038
    %1056 = vmatprep.subr.bf16.mxu0 0
    %1057 = vmatpush1.bf16.msra.mxu0 %v1040
    %1058 = vmatprep.subr.bf16.mxu0 0
    %1059 = vmatpush1.bf16.msra.mxu0 %v1041
    %1060 = vmatprep.subr.bf16.mxu0 0
    %1061 = vmatpush1.bf16.msra.mxu0 %v1042
    %1062 = vmatprep.subr.bf16.mxu0 0
    %1063 = vmatpush1.bf16.msra.mxu0 %v1043
    %1064 = vmatprep.subr.bf16.mxu0 0
    %1065 = vmatpush1.bf16.msra.mxu0 %v1044
    %1066 = vmatprep.subr.bf16.mxu0 0
    %1067 = vmatpush1.bf16.msra.mxu0 %v1045
    %1068 = vmatprep.subr.bf16.mxu0 0
    %1069 = vmatpush1.bf16.msra.mxu0 %v1046
    %1070 = vmatprep.subr.bf16.mxu0 0
    %1071 = vmatpush1.bf16.msra.mxu0 %v1047
    %1072 = vmatprep.subr.bf16.mxu0 0
    %1073 = vmatpush1.bf16.msra.mxu0 0
    %1074 = vmatprep.subr.bf16.mxu0 0
    %1075 = vmatpush1.bf16.msra.mxu0 0
    %1076 = vmatprep.subr.bf16.mxu0 0
    %1077 = vmatpush1.bf16.msra.mxu0 0
    %1078 = vmatprep.subr.bf16.mxu0 0
    %1079 = vmatpush1.bf16.msra.mxu0 0
    %1080 = vmatprep.subr.bf16.mxu0 0
    %1081 = vmatpush1.bf16.msra.mxu0 0
    %1082 = vmatprep.subr.bf16.mxu0 0
    %1083 = vmatpush1.bf16.msra.mxu0 0
    %1084 = vmatprep.subr.bf16.mxu0 0
    %1085 = vmatpush1.bf16.msra.mxu0 0
    %1086 = vmatprep.subr.bf16.mxu0 0
    %1087 = vmatpush1.bf16.msra.mxu0 0
    %1088 = vmatprep.mubr.bf16.mxu0 0
    %1089 = vmatmul.mubr.bf16.gmra.mrb[0].mxu0 %v1006
    %v1090 = vpop.f32.mrb[0].mxu0
    %v1091 = vadd.f32 0.0, %v1090
    %v1092 = vpop.f32.mrb[0].mxu0
    %v1093 = vpop.f32.mrb[0].mxu0
    %v1094 = vpop.f32.mrb[0].mxu0
    %1095 = vdwg.mxu0
    %v1096 = vadd.f32 %v988, %v1091
    %v1097 = vld [vmem:[%s4] sm:$0x1]
    %v1099 = vlaneseq
    %v1100 = vshrl.u32 %v1099, 7
    %v1101 = vsub.s32 0, %v1100
    %v1102 = vrot.slane %v1097, %v1101
    %v1104 = vadd.f32 %v1096, %v1102
    %v1105 = vmax.f32 %v1104, 0.0
    %v1106 = vpack.c.bf16 %v1105, %v1105
    %v1107 = vld [vmem:[%s5] sm:$0xf]
    %v1108 = vld [vmem:[%s5 + $0x4] sm:$0xf]
    %v1109 = vld [vmem:[%s5 + $0x8] sm:$0xf]
    %v1110 = vld [vmem:[%s5 + $0xc] sm:$0xf]
    %v1111 = vld [vmem:[%s5 + $0x10] sm:$0xf]
    %v1112 = vld [vmem:[%s5 + $0x14] sm:$0xf]
    %v1113 = vld [vmem:[%s5 + $0x18] sm:$0xf]
    %v1114 = vld [vmem:[%s5 + $0x1c] sm:$0xf]
    %v1115 = vld [vmem:[%s5 + $0x20] sm:$0xf]
    %v1116 = vld [vmem:[%s5 + $0x24] sm:$0xf]
    %v1117 = vld [vmem:[%s5 + $0x28] sm:$0xf]
    %v1118 = vld [vmem:[%s5 + $0x2c] sm:$0xf]
    %v1119 = vld [vmem:[%s5 + $0x30] sm:$0xf]
    %v1120 = vld [vmem:[%s5 + $0x34] sm:$0xf]
    %v1121 = vld [vmem:[%s5 + $0x38] sm:$0xf]
    %v1122 = vld [vmem:[%s5 + $0x3c] sm:$0xf]
    %v1123 = vld [vmem:[%s6] sm:$0x1]
    %v1125 = vlaneseq
    %v1126 = vshrl.u32 %v1125, 7
    %v1127 = vsub.s32 0, %v1126
    %v1128 = vrot.slane %v1123, %v1127
    %v1146 = vunpack.c.l.b16 %v1107
    %v1147 = vunpack.c.l.b16 %v1108
    %v1148 = vunpack.c.l.b16 %v1109
    %v1149 = vunpack.c.l.b16 %v1110
    %v1150 = vunpack.c.l.b16 %v1111
    %v1151 = vunpack.c.l.b16 %v1112
    %v1152 = vunpack.c.l.b16 %v1113
    %v1153 = vunpack.c.l.b16 %v1114
    %v1154 = vunpack.c.l.b16 %v1115
    %v1155 = vunpack.c.l.b16 %v1116
    %v1156 = vunpack.c.l.b16 %v1117
    %v1157 = vunpack.c.l.b16 %v1118
    %v1158 = vunpack.c.l.b16 %v1119
    %v1159 = vunpack.c.l.b16 %v1120
    %v1160 = vunpack.c.l.b16 %v1121
    %v1161 = vunpack.c.l.b16 %v1122
    %v1162 = vpack.c.b16 %v1147, %v1146
    %v1163 = vpack.c.b16 %v1149, %v1148
    %v1164 = vpack.c.b16 %v1151, %v1150
    %v1165 = vpack.c.b16 %v1153, %v1152
    %v1166 = vpack.c.b16 %v1155, %v1154
    %v1167 = vpack.c.b16 %v1157, %v1156
    %v1168 = vpack.c.b16 %v1159, %v1158
    %v1169 = vpack.c.b16 %v1161, %v1160
    %1178 = vmatprep.subr.bf16.mxu0 0
    %1179 = vmatpush1.bf16.msra.mxu0 %v1162
    %1180 = vmatprep.subr.bf16.mxu0 0
    %1181 = vmatpush1.bf16.msra.mxu0 %v1163
    %1182 = vmatprep.subr.bf16.mxu0 0
    %1183 = vmatpush1.bf16.msra.mxu0 %v1164
    %1184 = vmatprep.subr.bf16.mxu0 0
    %1185 = vmatpush1.bf16.msra.mxu0 %v1165
    %1186 = vmatprep.subr.bf16.mxu0 0
    %1187 = vmatpush1.bf16.msra.mxu0 %v1166
    %1188 = vmatprep.subr.bf16.mxu0 0
    %1189 = vmatpush1.bf16.msra.mxu0 %v1167
    %1190 = vmatprep.subr.bf16.mxu0 0
    %1191 = vmatpush1.bf16.msra.mxu0 %v1168
    %1192 = vmatprep.subr.bf16.mxu0 0
    %1193 = vmatpush1.bf16.msra.mxu0 %v1169
    %1194 = vmatprep.subr.bf16.mxu0 0
    %1195 = vmatpush1.bf16.msra.mxu0 0
    %1196 = vmatprep.subr.bf16.mxu0 0
    %1197 = vmatpush1.bf16.msra.mxu0 0
    %1198 = vmatprep.subr.bf16.mxu0 0
    %1199 = vmatpush1.bf16.msra.mxu0 0
    %1200 = vmatprep.subr.bf16.mxu0 0
    %1201 = vmatpush1.bf16.msra.mxu0 0
    %1202 = vmatprep.subr.bf16.mxu0 0
    %1203 = vmatpush1.bf16.msra.mxu0 0
    %1204 = vmatprep.subr.bf16.mxu0 0
    %1205 = vmatpush1.bf16.msra.mxu0 0
    %1206 = vmatprep.subr.bf16.mxu0 0
    %1207 = vmatpush1.bf16.msra.mxu0 0
    %1208 = vmatprep.subr.bf16.mxu0 0
    %1209 = vmatpush1.bf16.msra.mxu0 0
    %1210 = vmatprep.mubr.bf16.mxu0 0
    %1211 = vmatmul.mubr.bf16.gmra.mrb[0].mxu0 %v1106
    %v1212 = vpop.f32.mrb[0].mxu0
    %v1213 = vadd.f32 %v1128, %v1212
    %v1214 = vpop.f32.mrb[0].mxu0
    %v1215 = vpop.f32.mrb[0].mxu0
    %v1216 = vpop.f32.mrb[0].mxu0
    %1217 = vdwg.mxu0
    %v1218 = vmax.f32 %v1213, 0.0
    %v1219 = vpack.c.bf16 %v1218, %v1218
    %v1220 = vld [vmem:[%s7] sm:$0xf]
    %v1221 = vld [vmem:[%s7 + $0x4] sm:$0xf]
    %v1222 = vld [vmem:[%s7 + $0x8] sm:$0xf]
    %v1223 = vld [vmem:[%s7 + $0xc] sm:$0xf]
    %v1224 = vld [vmem:[%s7 + $0x10] sm:$0xf]
    %v1225 = vld [vmem:[%s7 + $0x14] sm:$0xf]
    %v1226 = vld [vmem:[%s7 + $0x18] sm:$0xf]
    %v1227 = vld [vmem:[%s7 + $0x1c] sm:$0xf]
    %v1228 = vld [vmem:[%s7 + $0x20] sm:$0xf]
    %v1229 = vld [vmem:[%s7 + $0x24] sm:$0xf]
    %v1230 = vld [vmem:[%s7 + $0x28] sm:$0xf]
    %v1231 = vld [vmem:[%s7 + $0x2c] sm:$0xf]
    %v1232 = vld [vmem:[%s7 + $0x30] sm:$0xf]
    %v1233 = vld [vmem:[%s7 + $0x34] sm:$0xf]
    %v1234 = vld [vmem:[%s7 + $0x38] sm:$0xf]
    %v1235 = vld [vmem:[%s7 + $0x3c] sm:$0xf]
    %v1236 = vld [vmem:[%s8] sm:$0x1]
    %v1238 = vlaneseq
    %v1239 = vshrl.u32 %v1238, 7
    %v1240 = vsub.s32 0, %v1239
    %v1241 = vrot.slane %v1236, %v1240
    %v1259 = vunpack.c.l.b16 %v1220
    %v1260 = vunpack.c.l.b16 %v1221
    %v1261 = vunpack.c.l.b16 %v1222
    %v1262 = vunpack.c.l.b16 %v1223
    %v1263 = vunpack.c.l.b16 %v1224
    %v1264 = vunpack.c.l.b16 %v1225
    %v1265 = vunpack.c.l.b16 %v1226
    %v1266 = vunpack.c.l.b16 %v1227
    %v1267 = vunpack.c.l.b16 %v1228
    %v1268 = vunpack.c.l.b16 %v1229
    %v1269 = vunpack.c.l.b16 %v1230
    %v1270 = vunpack.c.l.b16 %v1231
    %v1271 = vunpack.c.l.b16 %v1232
    %v1272 = vunpack.c.l.b16 %v1233
    %v1273 = vunpack.c.l.b16 %v1234
    %v1274 = vunpack.c.l.b16 %v1235
    %v1275 = vpack.c.b16 %v1260, %v1259
    %v1276 = vpack.c.b16 %v1262, %v1261
    %v1277 = vpack.c.b16 %v1264, %v1263
    %v1278 = vpack.c.b16 %v1266, %v1265
    %v1279 = vpack.c.b16 %v1268, %v1267
    %v1280 = vpack.c.b16 %v1270, %v1269
    %v1281 = vpack.c.b16 %v1272, %v1271
    %v1282 = vpack.c.b16 %v1274, %v1273
    %1291 = vmatprep.subr.bf16.mxu0 0
    %1292 = vmatpush1.bf16.msra.mxu0 %v1275
    %1293 = vmatprep.subr.bf16.mxu0 0
    %1294 = vmatpush1.bf16.msra.mxu0 %v1276
    %1295 = vmatprep.subr.bf16.mxu0 0
    %1296 = vmatpush1.bf16.msra.mxu0 %v1277
    %1297 = vmatprep.subr.bf16.mxu0 0
    %1298 = vmatpush1.bf16.msra.mxu0 %v1278
    %1299 = vmatprep.subr.bf16.mxu0 0
    %1300 = vmatpush1.bf16.msra.mxu0 %v1279
    %1301 = vmatprep.subr.bf16.mxu0 0
    %1302 = vmatpush1.bf16.msra.mxu0 %v1280
    %1303 = vmatprep.subr.bf16.mxu0 0
    %1304 = vmatpush1.bf16.msra.mxu0 %v1281
    %1305 = vmatprep.subr.bf16.mxu0 0
    %1306 = vmatpush1.bf16.msra.mxu0 %v1282
    %1307 = vmatprep.subr.bf16.mxu0 0
    %1308 = vmatpush1.bf16.msra.mxu0 0
    %1309 = vmatprep.subr.bf16.mxu0 0
    %1310 = vmatpush1.bf16.msra.mxu0 0
    %1311 = vmatprep.subr.bf16.mxu0 0
    %1312 = vmatpush1.bf16.msra.mxu0 0
    %1313 = vmatprep.subr.bf16.mxu0 0
    %1314 = vmatpush1.bf16.msra.mxu0 0
    %1315 = vmatprep.subr.bf16.mxu0 0
    %1316 = vmatpush1.bf16.msra.mxu0 0
    %1317 = vmatprep.subr.bf16.mxu0 0
    %1318 = vmatpush1.bf16.msra.mxu0 0
    %1319 = vmatprep.subr.bf16.mxu0 0
    %1320 = vmatpush1.bf16.msra.mxu0 0
    %1321 = vmatprep.subr.bf16.mxu0 0
    %1322 = vmatpush1.bf16.msra.mxu0 0
    %1323 = vmatprep.mubr.bf16.mxu0 0
    %1324 = vmatmul.mubr.bf16.gmra.mrb[0].mxu0 %v1219
    %v1325 = vpop.f32.mrb[0].mxu0
    %v1326 = vadd.f32 %v1241, %v1325
    %v1327 = vpop.f32.mrb[0].mxu0
    %v1328 = vpop.f32.mrb[0].mxu0
    %v1329 = vpop.f32.mrb[0].mxu0
    %1330 = vdwg.mxu0
    %v1331 = vmax.f32 %v1326, 0.0
    %v1332 = vpack.c.bf16 %v1331, %v1331
    %v1333 = vld [vmem:[%s9] sm:$0xf]
    %v1334 = vld [vmem:[%s9 + $0x4] sm:$0xf]
    %v1335 = vld [vmem:[%s9 + $0x8] sm:$0xf]
    %v1336 = vld [vmem:[%s9 + $0xc] sm:$0xf]
    %v1337 = vld [vmem:[%s9 + $0x10] sm:$0xf]
    %v1338 = vld [vmem:[%s9 + $0x14] sm:$0xf]
    %v1339 = vld [vmem:[%s9 + $0x18] sm:$0xf]
    %v1340 = vld [vmem:[%s9 + $0x1c] sm:$0xf]
    %v1341 = vld [vmem:[%s9 + $0x20] sm:$0xf]
    %v1342 = vld [vmem:[%s9 + $0x24] sm:$0xf]
    %v1343 = vld [vmem:[%s9 + $0x28] sm:$0xf]
    %v1344 = vld [vmem:[%s9 + $0x2c] sm:$0xf]
    %v1345 = vld [vmem:[%s9 + $0x30] sm:$0xf]
    %v1346 = vld [vmem:[%s9 + $0x34] sm:$0xf]
    %v1347 = vld [vmem:[%s9 + $0x38] sm:$0xf]
    %v1348 = vld [vmem:[%s9 + $0x3c] sm:$0xf]
    %v1349 = vld [vmem:[%s10] sm:$0x1]
    %v1351 = vlaneseq
    %v1352 = vshrl.u32 %v1351, 7
    %v1353 = vsub.s32 0, %v1352
    %v1354 = vrot.slane %v1349, %v1353
    %v1372 = vunpack.c.l.b16 %v1333
    %v1373 = vunpack.c.l.b16 %v1334
    %v1374 = vunpack.c.l.b16 %v1335
    %v1375 = vunpack.c.l.b16 %v1336
    %v1376 = vunpack.c.l.b16 %v1337
    %v1377 = vunpack.c.l.b16 %v1338
    %v1378 = vunpack.c.l.b16 %v1339
    %v1379 = vunpack.c.l.b16 %v1340
    %v1380 = vunpack.c.l.b16 %v1341
    %v1381 = vunpack.c.l.b16 %v1342
    %v1382 = vunpack.c.l.b16 %v1343
    %v1383 = vunpack.c.l.b16 %v1344
    %v1384 = vunpack.c.l.b16 %v1345
    %v1385 = vunpack.c.l.b16 %v1346
    %v1386 = vunpack.c.l.b16 %v1347
    %v1387 = vunpack.c.l.b16 %v1348
    %v1388 = vpack.c.b16 %v1373, %v1372
    %v1389 = vpack.c.b16 %v1375, %v1374
    %v1390 = vpack.c.b16 %v1377, %v1376
    %v1391 = vpack.c.b16 %v1379, %v1378
    %v1392 = vpack.c.b16 %v1381, %v1380
    %v1393 = vpack.c.b16 %v1383, %v1382
    %v1394 = vpack.c.b16 %v1385, %v1384
    %v1395 = vpack.c.b16 %v1387, %v1386
    %1404 = vmatprep.subr.bf16.mxu0 0
    %1405 = vmatpush1.bf16.msra.mxu0 %v1388
    %1406 = vmatprep.subr.bf16.mxu0 0
    %1407 = vmatpush1.bf16.msra.mxu0 %v1389
    %1408 = vmatprep.subr.bf16.mxu0 0
    %1409 = vmatpush1.bf16.msra.mxu0 %v1390
    %1410 = vmatprep.subr.bf16.mxu0 0
    %1411 = vmatpush1.bf16.msra.mxu0 %v1391
    %1412 = vmatprep.subr.bf16.mxu0 0
    %1413 = vmatpush1.bf16.msra.mxu0 %v1392
    %1414 = vmatprep.subr.bf16.mxu0 0
    %1415 = vmatpush1.bf16.msra.mxu0 %v1393
    %1416 = vmatprep.subr.bf16.mxu0 0
    %1417 = vmatpush1.bf16.msra.mxu0 %v1394
    %1418 = vmatprep.subr.bf16.mxu0 0
    %1419 = vmatpush1.bf16.msra.mxu0 %v1395
    %1420 = vmatprep.subr.bf16.mxu0 0
    %1421 = vmatpush1.bf16.msra.mxu0 0
    %1422 = vmatprep.subr.bf16.mxu0 0
    %1423 = vmatpush1.bf16.msra.mxu0 0
    %1424 = vmatprep.subr.bf16.mxu0 0
    %1425 = vmatpush1.bf16.msra.mxu0 0
    %1426 = vmatprep.subr.bf16.mxu0 0
    %1427 = vmatpush1.bf16.msra.mxu0 0
    %1428 = vmatprep.subr.bf16.mxu0 0
    %1429 = vmatpush1.bf16.msra.mxu0 0
    %1430 = vmatprep.subr.bf16.mxu0 0
    %1431 = vmatpush1.bf16.msra.mxu0 0
    %1432 = vmatprep.subr.bf16.mxu0 0
    %1433 = vmatpush1.bf16.msra.mxu0 0
    %1434 = vmatprep.subr.bf16.mxu0 0
    %1435 = vmatpush1.bf16.msra.mxu0 0
    %1436 = vmatprep.mubr.bf16.mxu0 0
    %1437 = vmatmul.mubr.bf16.gmra.mrb[0].mxu0 %v1332
    %v1438 = vpop.f32.mrb[0].mxu0
    %v1439 = vadd.f32 %v1354, %v1438
    %v1440 = vpop.f32.mrb[0].mxu0
    %v1441 = vpop.f32.mrb[0].mxu0
    %v1442 = vpop.f32.mrb[0].mxu0
    %1443 = vdwg.mxu0
    %v1444 = vmax.f32 %v1439, 0.0
    %v1445 = vpack.c.bf16 %v1444, %v1444
    %v1446 = vld [vmem:[%s11] sm:$0xf]
    %v1447 = vld [vmem:[%s11 + $0x4] sm:$0xf]
    %v1448 = vld [vmem:[%s11 + $0x8] sm:$0xf]
    %v1449 = vld [vmem:[%s11 + $0xc] sm:$0xf]
    %v1450 = vld [vmem:[%s11 + $0x10] sm:$0xf]
    %v1451 = vld [vmem:[%s11 + $0x14] sm:$0xf]
    %v1452 = vld [vmem:[%s11 + $0x18] sm:$0xf]
    %v1453 = vld [vmem:[%s11 + $0x1c] sm:$0xf]
    %v1454 = vld [vmem:[%s11 + $0x20] sm:$0xf]
    %v1455 = vld [vmem:[%s11 + $0x24] sm:$0xf]
    %v1456 = vld [vmem:[%s11 + $0x28] sm:$0xf]
    %v1457 = vld [vmem:[%s11 + $0x2c] sm:$0xf]
    %v1458 = vld [vmem:[%s11 + $0x30] sm:$0xf]
    %v1459 = vld [vmem:[%s11 + $0x34] sm:$0xf]
    %v1460 = vld [vmem:[%s11 + $0x38] sm:$0xf]
    %v1461 = vld [vmem:[%s11 + $0x3c] sm:$0xf]
    %v1462 = vld [vmem:[%s12] sm:$0x1]
    %v1464 = vlaneseq
    %v1465 = vshrl.u32 %v1464, 7
    %v1466 = vsub.s32 0, %v1465
    %v1467 = vrot.slane %v1462, %v1466
    %v1485 = vunpack.c.l.b16 %v1446
    %v1486 = vunpack.c.l.b16 %v1447
    %v1487 = vunpack.c.l.b16 %v1448
    %v1488 = vunpack.c.l.b16 %v1449
    %v1489 = vunpack.c.l.b16 %v1450
    %v1490 = vunpack.c.l.b16 %v1451
    %v1491 = vunpack.c.l.b16 %v1452
    %v1492 = vunpack.c.l.b16 %v1453
    %v1493 = vunpack.c.l.b16 %v1454
    %v1494 = vunpack.c.l.b16 %v1455
    %v1495 = vunpack.c.l.b16 %v1456
    %v1496 = vunpack.c.l.b16 %v1457
    %v1497 = vunpack.c.l.b16 %v1458
    %v1498 = vunpack.c.l.b16 %v1459
    %v1499 = vunpack.c.l.b16 %v1460
    %v1500 = vunpack.c.l.b16 %v1461
    %v1501 = vpack.c.b16 %v1486, %v1485
    %v1502 = vpack.c.b16 %v1488, %v1487
    %v1503 = vpack.c.b16 %v1490, %v1489
    %v1504 = vpack.c.b16 %v1492, %v1491
    %v1505 = vpack.c.b16 %v1494, %v1493
    %v1506 = vpack.c.b16 %v1496, %v1495
    %v1507 = vpack.c.b16 %v1498, %v1497
    %v1508 = vpack.c.b16 %v1500, %v1499
    %1517 = vmatprep.subr.bf16.mxu0 0
    %1518 = vmatpush1.bf16.msra.mxu0 %v1501
    %1519 = vmatprep.subr.bf16.mxu0 0
    %1520 = vmatpush1.bf16.msra.mxu0 %v1502
    %1521 = vmatprep.subr.bf16.mxu0 0
    %1522 = vmatpush1.bf16.msra.mxu0 %v1503
    %1523 = vmatprep.subr.bf16.mxu0 0
    %1524 = vmatpush1.bf16.msra.mxu0 %v1504
    %1525 = vmatprep.subr.bf16.mxu0 0
    %1526 = vmatpush1.bf16.msra.mxu0 %v1505
    %1527 = vmatprep.subr.bf16.mxu0 0
    %1528 = vmatpush1.bf16.msra.mxu0 %v1506
    %1529 = vmatprep.subr.bf16.mxu0 0
    %1530 = vmatpush1.bf16.msra.mxu0 %v1507
    %1531 = vmatprep.subr.bf16.mxu0 0
    %1532 = vmatpush1.bf16.msra.mxu0 %v1508
    %1533 = vmatprep.subr.bf16.mxu0 0
    %1534 = vmatpush1.bf16.msra.mxu0 0
    %1535 = vmatprep.subr.bf16.mxu0 0
    %1536 = vmatpush1.bf16.msra.mxu0 0
    %1537 = vmatprep.subr.bf16.mxu0 0
    %1538 = vmatpush1.bf16.msra.mxu0 0
    %1539 = vmatprep.subr.bf16.mxu0 0
    %1540 = vmatpush1.bf16.msra.mxu0 0
    %1541 = vmatprep.subr.bf16.mxu0 0
    %1542 = vmatpush1.bf16.msra.mxu0 0
    %1543 = vmatprep.subr.bf16.mxu0 0
    %1544 = vmatpush1.bf16.msra.mxu0 0
    %1545 = vmatprep.subr.bf16.mxu0 0
    %1546 = vmatpush1.bf16.msra.mxu0 0
    %1547 = vmatprep.subr.bf16.mxu0 0
    %1548 = vmatpush1.bf16.msra.mxu0 0
    %1549 = vmatprep.mubr.bf16.mxu0 0
    %1550 = vmatmul.mubr.bf16.gmra.mrb[0].mxu0 %v1445
    %v1551 = vpop.f32.mrb[0].mxu0
    %v1552 = vadd.f32 %v1467, %v1551
    %v1553 = vpop.f32.mrb[0].mxu0
    %v1554 = vpop.f32.mrb[0].mxu0
    %v1555 = vpop.f32.mrb[0].mxu0
    %1556 = vdwg.mxu0
    %v1557 = vmax.f32 %v1552, 0.0
    %1558 = vst [vmem:[#allocation2] sm:$0x3] %v1557
    // Predicated region
    $region54: #{dummy_network_forward.3} parent=1 // pred_check
      _
    $region55: #{dummy_network_forward.3} parent=1 // pred_check_branch
      %1560 = sbr.rel (0) target = $region57
    $region56: #{dummy_network_forward.3} parent=1 // pred_region
      %s1562 = ssub.s32 32, 32
      %1563 = vsyncadd [#allocation3], %s1562
      %s1565 = sshll.u32 [#allocation2], 4
      %s1566 = int_to_ptr.vmem [resolvable:$true] %s1565
      %1568 = dma.vmem_to_hbm [thread:$0]  %s1566, 32, %s13, [#allocation3]
    $region57: #{dummy_network_forward.3} parent=1 // pred_fallthru
      _
    // Predicated region
    $region58: #{dummy_network_forward.3} parent=1 // pred_check
      _
    $region59: #{dummy_network_forward.3} parent=1 // pred_check_branch
      %1570 = sbr.rel (0) target = $region61
    $region60: #{dummy_network_forward.3} parent=1 // pred_region
      %1571 = dma.done [#allocation3], 32
    $region61: #{dummy_network_forward.3} parent=1 // pred_fallthru
      _
    %1572 = vsyncpa [#allocation3], 1

</llo_original>
